<compile_context>
chip_gen: v6e
topology: v6e:2x2x1
jax: 0.10.0
libtpu: 0.0.40
codegen_flags: <defaults>
</compile_context>

<pallas_src>
import jax
import jax.numpy as jnp
from jax.experimental import pallas as pl
from jax.experimental.pallas import tpu as pltpu


def _softmax_last(a):
    """Softmax over the last axis; the divide goes to the EUP (approx recip)."""
    m = jnp.max(a, axis=-1, keepdims=True)
    e = jnp.exp(a - m)
    return e * pl.reciprocal(jnp.sum(e, axis=-1, keepdims=True), approx=True)


def _b2opt_kernel(x_ref, pre_attn_ref, w1t_ref, w2t_ref, pcoef_ref, fmix_ref,
                  xout_ref, trail_ref, fit_scr):
    """One (batch tile, OB step) of B2opt.forward: sortpop -> AttnWithFit -> mut -> SM."""
    Bt, N, D = x_ref.shape
    EMS = trail_ref.shape[1]
    e = pl.program_id(1)

    # ---- first OB of this batch tile: load population, seed father fitness ----
    @pl.when(e == 0)
    def _():
        x0 = x_ref[...]
        xout_ref[...] = x0
        fit_scr[...] = jnp.sum(x0 * x0, axis=-1)        # sphere objective (TODO above)
        trail_ref[...] = jnp.zeros_like(trail_ref)

    x = xout_ref[...]                                    # (Bt, N, D) resident across EMS
    fit = fit_scr[...]                                   # (Bt, N) father fitness (carried)

    # ---- trail[:, e] = min father fitness (min is sort-invariant) ----
    best = jnp.min(fit, axis=-1, keepdims=True)          # (Bt, 1)
    ecol = jax.lax.broadcasted_iota(jnp.int32, (1, EMS), 1)
    trail_ref[...] = trail_ref[...] + best * (ecol == e).astype(jnp.float32)

    # ---- BaseModel.sortpop: stable ascending sort via rank + one-hot gather ----
    row_i = jax.lax.broadcasted_iota(jnp.int32, (N, N), 0)
    col_j = jax.lax.broadcasted_iota(jnp.int32, (N, N), 1)
    fi = fit[:, :, None]                                 # (Bt, N, 1)
    fj = fit[:, None, :]                                 # (Bt, 1, N)
    less = (fj < fi).astype(jnp.int32)
    ties = ((fj == fi) & (col_j < row_i)[None]).astype(jnp.int32)
    rank = jnp.sum(less + ties, axis=-1)                 # (Bt, N) in [0, N)
    perm = (rank[:, None, :] == row_i[None]).astype(jnp.float32)   # (Bt, N, N), 0/1
    # f32 gather keeps the population permutation bit-exact.
    x = jnp.einsum('bij,bjd->bid', perm, x, preferred_element_type=jnp.float32)
    fit = jnp.sum(perm * fit[:, None, :], axis=-1)       # sorted fitness (exact)

    # ---- per-OB coefficients (row 2 of pcoef: [scale*qw.kw, scale*qb.kw, F1]) ----
    b1 = pcoef_ref[0, 0:1, :]                            # (1, D)
    b2 = pcoef_ref[0, 1:2, :]                            # (1, D)
    a_qk = pcoef_ref[:, 2:3, 0:1]                        # (1, 1, 1)
    b_qk = pcoef_ref[:, 2:3, 1:2]                        # (1, 1, 1)
    f1w = pcoef_ref[:, 2:3, 2:3]                         # (1, 1, 1)  softmax(F)[1]

    # ---- AttnWithFit (rank-1 closed form; row-constant logit terms cancel) ----
    fitx = _softmax_last(fit)                            # (Bt, N)
    qn = fitx[:, :, None]                                # (Bt, N, 1)
    km = fitx[:, None, :]                                # (Bt, 1, N)
    logits = qn * (a_qk * km) + b_qk * km                # (Bt, N, N)
    fitattn = _softmax_last(logits)                      # (Bt, N, N)
    mix = pre_attn_ref[...] + f1w * fitattn              # F0*softmax(attn) hoisted to host
    crosspop = jnp.einsum('bnm,bmd->bnd', mix.astype(jnp.bfloat16),
                          x.astype(jnp.bfloat16),
                          preferred_element_type=jnp.float32)       # (Bt, N, D)

    # ---- mut MLP over (Bt*N, D) rows, bf16 MXU operands, f32 accumulation ----
    cp2 = crosspop.reshape(Bt * N, D).astype(jnp.bfloat16)
    h1 = jnp.maximum(
        jnp.dot(cp2, w1t_ref[0], preferred_element_type=jnp.float32) + b1, 0.0)
    offpop = (jnp.dot(h1.astype(jnp.bfloat16), w2t_ref[0],
                      preferred_element_type=jnp.float32) + b2).reshape(Bt, N, D)

    # ---- offspring mix + child fitness + SM selection (minimize) ----
    f1 = fmix_ref[0, :, 0:1][None]                       # (1, N, 1)
    f2 = fmix_ref[0, :, 1:2][None]
    f3 = fmix_ref[0, :, 2:3][None]
    off = f1 * x + f2 * crosspop + f3 * offpop
    childfit = jnp.sum(off * off, axis=-1)               # (Bt, N)
    keep_father = fit < childfit                         # ties -> offspring
    xout_ref[...] = jnp.where(keep_father[:, :, None], x, off)
    # Carry survivor fitness (exact for the sphere objective) into the next OB step.
    fit_scr[...] = jnp.where(keep_father, fit, childfit)


# ------------------------------ JAX wrappers --------------------------------

def pack_params(params_list, dim):
    """Precompute parameter-only terms and pack them into lane-friendly arrays."""
    N = params_list[0]["attn"].shape[-1]
    D = dim
    assert D >= 3, "dim must be >= 3 to pack the per-OB scalar coefficients"
    scale = float(D) ** -0.5

    pre_attn, w1t, w2t, pcoef, fmix = [], [], [], [], []
    for p in params_list:
        fsm = jax.nn.softmax(p["F"].astype(jnp.float32))
        attn_sm = jax.nn.softmax(p["attn"][0].astype(jnp.float32), axis=-1)
        pre_attn.append(fsm[0] * attn_sm)                       # F0 * softmax(attn)
        w1t.append(p["w1"].T.astype(jnp.bfloat16))              # Linear: y = x @ W.T + b
        w2t.append(p["w2"].T.astype(jnp.bfloat16))
        qw = jnp.ravel(p["q_w"]).astype(jnp.float32)
        kw = jnp.ravel(p["k_w"]).astype(jnp.float32)
        qb = p["q_b"].astype(jnp.float32)
        # q_b.k_b and fitx_n*(q_w.k_b) are constant over the softmax axis -> dropped.
        coefs = jnp.stack([scale * jnp.dot(qw, kw),
                           scale * jnp.dot(qb, kw),
                           fsm[1]])
        coef_row = jnp.concatenate([coefs, jnp.zeros((D - 3,), jnp.float32)])
        pcoef.append(jnp.stack([p["b1"].astype(jnp.float32),
                                p["b2"].astype(jnp.float32),
                                coef_row]))                     # (3, D)
        fmix.append(jnp.concatenate(
            [p["f1"].reshape(N, 1), p["f2"].reshape(N, 1), p["f3"].reshape(N, 1)],
            axis=-1).astype(jnp.float32))                       # (N, 3)
    return {
        "pre_attn": jnp.stack(pre_attn),   # (EMS, N, N) f32
        "w1t": jnp.stack(w1t),             # (EMS, D, D) bf16
        "w2t": jnp.stack(w2t),             # (EMS, D, D) bf16
        "pcoef": jnp.stack(pcoef),         # (EMS, 3, D) f32: b1 / b2 / [a, b, F1]
        "fmix": jnp.stack(fmix),           # (EMS, N, 3) f32
    }


def _pick_batch_tile(B, N):
    """Batch tile: divides B, is a multiple of 8 (or equals B, for the trail block),
    and keeps Bt*N >= ~256 when possible so the mut-MLP LHS fills the MXU."""
    target = max(1, -(-256 // N))
    candidates = sorted(bt for bt in range(1, B + 1)
                        if B % bt == 0 and (bt == B or bt % 8 == 0))
    for bt in candidates:
        if bt >= target:
            return bt
    return B


@jax.jit
def _b2opt_call(x, packed):
    B, N, D = x.shape
    EMS = packed["pre_attn"].shape[0]
    bt = _pick_batch_tile(B, N)
    grid = (B // bt, EMS)

    # Rough cost model (advisory only).
    flops = EMS * B * (4 * N * N * D + 4 * N * D * D + 6 * N * N + 12 * N * D)
    transcendentals = EMS * B * (N + N * N)
    param_bytes = (4 * EMS * N * N + 2 * 2 * EMS * D * D
                   + 4 * EMS * 3 * D + 4 * EMS * N * 3)
    bytes_accessed = 8 * B * N * D + 4 * B * EMS + (B // bt) * param_bytes

    # VMEM budget: double-buffered x / params / trail + per-OB intermediates.
    blk_param = 4 * N * N + 2 * 2 * D * D + 4 * 3 * D + 4 * N * 3
    est = (4 * 4 * bt * N * D + 2 * blk_param + 2 * 4 * bt * EMS + 4 * bt * N
           + 16 * bt * N * N + 24 * bt * N * D)
    vmem_limit = int(min(64 * 2 ** 20, max(32 * 2 ** 20, 2 * est)))

    return pl.pallas_call(
        _b2opt_kernel,
        grid=grid,
        in_specs=[
            pl.BlockSpec((bt, N, D), lambda b, e: (b, 0, 0)),   # x (fetched once per b)
            pl.BlockSpec((1, N, N), lambda b, e: (e, 0, 0)),    # F0 * softmax(attn)
            pl.BlockSpec((1, D, D), lambda b, e: (e, 0, 0)),    # w1^T (bf16)
            pl.BlockSpec((1, D, D), lambda b, e: (e, 0, 0)),    # w2^T (bf16)
            pl.BlockSpec((1, 3, D), lambda b, e: (e, 0, 0)),    # b1 / b2 / coeffs
            pl.BlockSpec((1, N, 3), lambda b, e: (e, 0, 0)),    # f1 / f2 / f3
        ],
        out_specs=(
            pl.BlockSpec((bt, N, D), lambda b, e: (b, 0, 0)),   # resident across EMS
            pl.BlockSpec((bt, EMS), lambda b, e: (b, 0)),       # resident across EMS
        ),
        out_shape=(jax.ShapeDtypeStruct((B, N, D), jnp.float32),
                   jax.ShapeDtypeStruct((B, EMS), jnp.float32)),
        scratch_shapes=[pltpu.VMEM((bt, N), jnp.float32)],      # carried father fitness
        input_output_aliases={0: 0},       # reuse the population HBM buffer in place
        compiler_params=pltpu.CompilerParams(
            dimension_semantics=("parallel", "arbitrary"),
            vmem_limit_bytes=vmem_limit),
        cost_estimate=pl.CostEstimate(flops=flops,
                                      transcendentals=transcendentals,
                                      bytes_accessed=bytes_accessed),
    )(x, packed["pre_attn"], packed["w1t"], packed["w2t"],
      packed["pcoef"], packed["fmix"])


def b2opt_forward(x, params_list):
    """B2opt.forward with ws=False (one independent OB per evolution step)."""
    N, D = x.shape[1], x.shape[2]
    packed = pack_params(params_list, D)
    xout, trail = _b2opt_call(x.astype(jnp.float32), packed)
    evalnum = [N]
    for _ in range(len(params_list)):
        evalnum.append(evalnum[-1] + N)
    return xout, trail, evalnum


def init_ob_params(key, dim, hidden, pop):
    """Deterministic synthetic init matching OB/AttnWithFit parameter shapes."""
    ks = jax.random.split(key, 13)
    rnd = lambda k, shape, scale=1.0: (
        jax.random.normal(k, shape, jnp.float32) * scale)
    return {
        "attn": rnd(ks[0], (1, pop, pop)),            # AttnWithFit.attn
        "q_w": rnd(ks[1], (hidden, 1)),               # nn.Linear(1, H).weight
        "q_b": rnd(ks[2], (hidden,), 0.1),
        "k_w": rnd(ks[3], (hidden, 1)),
        "k_b": rnd(ks[4], (hidden,), 0.1),            # cancels inside the softmax
        "F": rnd(ks[5], (2,)),
        "w1": rnd(ks[6], (dim, dim), dim ** -0.5),    # mut[0].weight (out, in)
        "b1": rnd(ks[7], (dim,), 0.1),
        "w2": rnd(ks[8], (dim, dim), dim ** -0.5),    # mut[2].weight
        "b2": rnd(ks[9], (dim,), 0.1),
        "f1": rnd(ks[10], (1, pop, 1)),
        "f2": rnd(ks[11], (1, pop, 1)),
        "f3": rnd(ks[12], (1, pop, 1)),
    }


if __name__ == "__main__":
    B, N, D, H, EMS = 2, 8, 32, 32, 3     # batch, popSize, dim, hidden_dim, ems
    key = jax.random.PRNGKey(0)
    kx, kp = jax.random.split(key)
    x = jax.random.normal(kx, (B, N, D), jnp.float32)
    params_list = [init_ob_params(k, D, H, N) for k in jax.random.split(kp, EMS)]

    out, trail, evalnum = b2opt_forward(x, params_list)
    jax.block_until_ready(out)
    jax.block_until_ready(trail)
    assert out.shape == (B, N, D)
    assert trail.shape == (B, EMS)
    assert evalnum == [N * (i + 1) for i in range(EMS + 1)]
    assert bool(jnp.all(jnp.isfinite(out))) and bool(jnp.all(jnp.isfinite(trail)))
    print("KERNEL_OK")
</pallas_src>

<mosaic_0001>
module attributes {stable_mosaic.version = 11 : i64} {
  func.func @_b2opt_kernel(%arg0: i32, %arg1: i32, %arg2: memref<2x8x32xf32, #tpu.memory_space<vmem>>, %arg3: memref<1x8x8xf32, #tpu.memory_space<vmem>>, %arg4: memref<1x32x32xbf16, #tpu.memory_space<vmem>>, %arg5: memref<1x32x32xbf16, #tpu.memory_space<vmem>>, %arg6: memref<1x3x32xf32, #tpu.memory_space<vmem>>, %arg7: memref<1x8x3xf32, #tpu.memory_space<vmem>>, %arg8: memref<2x8x32xf32, #tpu.memory_space<vmem>>, %arg9: memref<2x3xf32, #tpu.memory_space<vmem>>, %arg10: memref<2x8xf32, #tpu.memory_space<vmem>>) attributes {dimension_semantics = [#tpu.dimension_semantics<parallel>, #tpu.dimension_semantics<arbitrary>], iteration_bounds = array<i64: 1, 3>, scalar_prefetch = 0 : i64, scratch_operands = 1 : i64, tpu.core_type = #tpu.core_type<tc>, window_params = [{transform_indices = @transform_0, window_bounds = array<i64: 2, 8, 32>}, {transform_indices = @transform_1, window_bounds = array<i64: 1, 8, 8>}, {transform_indices = @transform_2, window_bounds = array<i64: 1, 32, 32>}, {transform_indices = @transform_3, window_bounds = array<i64: 1, 32, 32>}, {transform_indices = @transform_4, window_bounds = array<i64: 1, 3, 32>}, {transform_indices = @transform_5, window_bounds = array<i64: 1, 8, 3>}, {transform_indices = @transform_6, window_bounds = array<i64: 2, 8, 32>}, {transform_indices = @transform_7, window_bounds = array<i64: 2, 3>}]} {
    %c0_i32 = arith.constant 0 : i32
    %0 = arith.cmpi eq, %arg1, %c0_i32 : i32
    %1 = arith.extui %0 : i1 to i32
    %c0_i32_0 = arith.constant 0 : i32
    %2 = arith.cmpi ne, %1, %c0_i32_0 : i32
    scf.if %2 {
      %c0_57 = arith.constant 0 : index
      %c0_58 = arith.constant 0 : index
      %c0_59 = arith.constant 0 : index
      %137 = vector.load %arg2[%c0_57, %c0_58, %c0_59] : memref<2x8x32xf32, #tpu.memory_space<vmem>>, vector<2x8x32xf32>
      %c0_60 = arith.constant 0 : index
      %c0_61 = arith.constant 0 : index
      %c0_62 = arith.constant 0 : index
      %138 = vector.load %arg8[%c0_60, %c0_61, %c0_62] : memref<2x8x32xf32, #tpu.memory_space<vmem>>, vector<2x8x32xf32>
      tpu.vector_store %arg8[%c0_60, %c0_61, %c0_62], %137 {strides = array<i32>} : memref<2x8x32xf32, #tpu.memory_space<vmem>>, vector<2x8x32xf32>,
      %139 = arith.mulf %137, %137 : vector<2x8x32xf32>
      %cst_63 = arith.constant dense<0.000000e+00> : vector<2x8xf32>
      %140 = vector.multi_reduction <add>, %139, %cst_63 [2] : vector<2x8x32xf32> to vector<2x8xf32>
      %c0_64 = arith.constant 0 : index
      %c0_65 = arith.constant 0 : index
      %141 = vector.load %arg10[%c0_64, %c0_65] : memref<2x8xf32, #tpu.memory_space<vmem>>, vector<2x8xf32>
      tpu.vector_store %arg10[%c0_64, %c0_65], %140 {strides = array<i32>} : memref<2x8xf32, #tpu.memory_space<vmem>>, vector<2x8xf32>,
      %cst_66 = arith.constant 0.000000e+00 : f32
      %142 = vector.broadcast %cst_66 : f32 to vector<2x3xf32>
      %c0_67 = arith.constant 0 : index
      %c0_68 = arith.constant 0 : index
      %143 = vector.load %arg9[%c0_67, %c0_68] : memref<2x3xf32, #tpu.memory_space<vmem>>, vector<2x3xf32>
      tpu.vector_store %arg9[%c0_67, %c0_68], %142 {strides = array<i32>} : memref<2x3xf32, #tpu.memory_space<vmem>>, vector<2x3xf32>,
    } else {
    }
    %c0 = arith.constant 0 : index
    %c0_1 = arith.constant 0 : index
    %c0_2 = arith.constant 0 : index
    %3 = vector.load %arg8[%c0, %c0_1, %c0_2] : memref<2x8x32xf32, #tpu.memory_space<vmem>>, vector<2x8x32xf32>
    %c0_3 = arith.constant 0 : index
    %c0_4 = arith.constant 0 : index
    %4 = vector.load %arg10[%c0_3, %c0_4] : memref<2x8xf32, #tpu.memory_space<vmem>>, vector<2x8xf32>
    %cst = arith.constant dense<0x7F800000> : vector<2xf32>
    %5 = vector.multi_reduction <minimumf>, %4, %cst [1] : vector<2x8xf32> to vector<2xf32>
    %6 = vector.shape_cast %5 : vector<2xf32> to vector<2x1xf32>
    %7 = tpu.iota {dimensions = array<i32: 1>} : vector<1x3xi32>
    %c0_5 = arith.constant 0 : index
    %c0_6 = arith.constant 0 : index
    %8 = vector.load %arg9[%c0_5, %c0_6] : memref<2x3xf32, #tpu.memory_space<vmem>>, vector<2x3xf32>
    %9 = vector.broadcast %arg1 : i32 to vector<1x3xi32>
    %10 = arith.cmpi eq, %7, %9 : vector<1x3xi32>
    %11 = arith.extui %10 : vector<1x3xi1> to vector<1x3xi32>
    %12 = arith.sitofp %11 : vector<1x3xi32> to vector<1x3xf32>
    %13 = vector.broadcast %6 : vector<2x1xf32> to vector<2x3xf32>
    %14 = vector.broadcast %12 : vector<1x3xf32> to vector<2x3xf32>
    %15 = arith.mulf %13, %14 : vector<2x3xf32>
    %16 = arith.addf %8, %15 : vector<2x3xf32>
    %c0_7 = arith.constant 0 : index
    %c0_8 = arith.constant 0 : index
    %17 = vector.load %arg9[%c0_7, %c0_8] : memref<2x3xf32, #tpu.memory_space<vmem>>, vector<2x3xf32>
    tpu.vector_store %arg9[%c0_7, %c0_8], %16 {strides = array<i32>} : memref<2x3xf32, #tpu.memory_space<vmem>>, vector<2x3xf32>,
    %18 = tpu.iota {dimensions = array<i32: 0>} : vector<8x8xi32>
    %19 = tpu.iota {dimensions = array<i32: 1>} : vector<8x8xi32>
    %20 = vector.shape_cast %4 : vector<2x8xf32> to vector<2x8x1xf32>
    %21 = vector.shape_cast %4 : vector<2x8xf32> to vector<2x1x8xf32>
    %22 = vector.broadcast %21 : vector<2x1x8xf32> to vector<2x8x8xf32>
    %23 = vector.broadcast %20 : vector<2x8x1xf32> to vector<2x8x8xf32>
    %24 = arith.cmpf olt, %22, %23 : vector<2x8x8xf32>
    %25 = arith.extui %24 : vector<2x8x8xi1> to vector<2x8x8xi32>
    %26 = vector.broadcast %21 : vector<2x1x8xf32> to vector<2x8x8xf32>
    %27 = vector.broadcast %20 : vector<2x8x1xf32> to vector<2x8x8xf32>
    %28 = arith.cmpf oeq, %26, %27 : vector<2x8x8xf32>
    %29 = arith.cmpi slt, %19, %18 : vector<8x8xi32>
    %30 = vector.shape_cast %29 : vector<8x8xi1> to vector<1x8x8xi1>
    %31 = vector.broadcast %30 : vector<1x8x8xi1> to vector<2x8x8xi1>
    %32 = arith.andi %28, %31 : vector<2x8x8xi1>
    %33 = arith.extui %32 : vector<2x8x8xi1> to vector<2x8x8xi32>
    %34 = arith.addi %25, %33 : vector<2x8x8xi32>
    %cst_9 = arith.constant dense<0> : vector<2x8xi32>
    %35 = vector.multi_reduction <add>, %34, %cst_9 [2] : vector<2x8x8xi32> to vector<2x8xi32>
    %36 = vector.shape_cast %35 : vector<2x8xi32> to vector<2x1x8xi32>
    %37 = vector.shape_cast %18 : vector<8x8xi32> to vector<1x8x8xi32>
    %38 = vector.broadcast %36 : vector<2x1x8xi32> to vector<2x8x8xi32>
    %39 = vector.broadcast %37 : vector<1x8x8xi32> to vector<2x8x8xi32>
    %40 = arith.cmpi eq, %38, %39 : vector<2x8x8xi32>
    %41 = arith.extui %40 : vector<2x8x8xi1> to vector<2x8x8xi32>
    %42 = arith.sitofp %41 : vector<2x8x8xi32> to vector<2x8x8xf32>
    "tpu.trace_start"() <{level = 10 : i32, message = "bij,bjd->bid"}> : () -> ()
    %cst_10 = arith.constant dense<0.000000e+00> : vector<2x8x32xf32>
    %43 = tpu.matmul %42, %3, %cst_10 {dimension_numbers = #tpu.dot_dimension_numbers<[2], [1], [1], [2], [0, 0, 0, 1, 1, 2], [0], [0]>} : vector<2x8x8xf32>, vector<2x8x32xf32>, vector<2x8x32xf32> -> vector<2x8x32xf32>
    "tpu.trace_stop"() : () -> ()
    %44 = vector.shape_cast %4 : vector<2x8xf32> to vector<2x1x8xf32>
    %45 = vector.broadcast %44 : vector<2x1x8xf32> to vector<2x8x8xf32>
    %46 = arith.mulf %42, %45 : vector<2x8x8xf32>
    %cst_11 = arith.constant dense<0.000000e+00> : vector<2x8xf32>
    %47 = vector.multi_reduction <add>, %46, %cst_11 [2] : vector<2x8x8xf32> to vector<2x8xf32>
    %c0_12 = arith.constant 0 : index
    %c0_13 = arith.constant 0 : index
    %c0_14 = arith.constant 0 : index
    %48 = vector.load %arg6[%c0_12, %c0_13, %c0_14] : memref<1x3x32xf32, #tpu.memory_space<vmem>>, vector<1x1x32xf32>
    %49 = vector.shape_cast %48 : vector<1x1x32xf32> to vector<1x32xf32>
    %c0_15 = arith.constant 0 : index
    %c1 = arith.constant 1 : index
    %c0_16 = arith.constant 0 : index
    %50 = vector.load %arg6[%c0_15, %c1, %c0_16] : memref<1x3x32xf32, #tpu.memory_space<vmem>>, vector<1x1x32xf32>
    %51 = vector.shape_cast %50 : vector<1x1x32xf32> to vector<1x32xf32>
    %c0_17 = arith.constant 0 : index
    %c2 = arith.constant 2 : index
    %c0_18 = arith.constant 0 : index
    %52 = vector.load %arg6[%c0_17, %c2, %c0_18] : memref<1x3x32xf32, #tpu.memory_space<vmem>>, vector<1x1x1xf32>
    %c0_19 = arith.constant 0 : index
    %c2_20 = arith.constant 2 : index
    %c1_21 = arith.constant 1 : index
    %53 = vector.load %arg6[%c0_19, %c2_20, %c1_21] : memref<1x3x32xf32, #tpu.memory_space<vmem>>, vector<1x1x1xf32>
    %c0_22 = arith.constant 0 : index
    %c2_23 = arith.constant 2 : index
    %c2_24 = arith.constant 2 : index
    %54 = vector.load %arg6[%c0_22, %c2_23, %c2_24] : memref<1x3x32xf32, #tpu.memory_space<vmem>>, vector<1x1x1xf32>
    %cst_25 = arith.constant dense<0xFF800000> : vector<2xf32>
    %55 = vector.multi_reduction <maximumf>, %47, %cst_25 [1] : vector<2x8xf32> to vector<2xf32>
    %56 = vector.shape_cast %55 : vector<2xf32> to vector<2x1xf32>
    %57 = vector.broadcast %56 : vector<2x1xf32> to vector<2x8xf32>
    %58 = arith.subf %47, %57 : vector<2x8xf32>
    %59 = math.exp %58 : vector<2x8xf32>
    %cst_26 = arith.constant dense<0.000000e+00> : vector<2xf32>
    %60 = vector.multi_reduction <add>, %59, %cst_26 [1] : vector<2x8xf32> to vector<2xf32>
    %61 = vector.shape_cast %60 : vector<2xf32> to vector<2x1xf32>
    %62 = tpu.reciprocal %61 {approx = true} : vector<2x1xf32> -> vector<2x1xf32>
    %63 = vector.broadcast %62 : vector<2x1xf32> to vector<2x8xf32>
    %64 = arith.mulf %59, %63 : vector<2x8xf32>
    %65 = vector.shape_cast %64 : vector<2x8xf32> to vector<2x8x1xf32>
    %66 = vector.shape_cast %64 : vector<2x8xf32> to vector<2x1x8xf32>
    %67 = vector.broadcast %52 : vector<1x1x1xf32> to vector<2x1x8xf32>
    %68 = arith.mulf %67, %66 : vector<2x1x8xf32>
    %69 = vector.broadcast %65 : vector<2x8x1xf32> to vector<2x8x8xf32>
    %70 = vector.broadcast %68 : vector<2x1x8xf32> to vector<2x8x8xf32>
    %71 = arith.mulf %69, %70 : vector<2x8x8xf32>
    %72 = vector.broadcast %53 : vector<1x1x1xf32> to vector<2x1x8xf32>
    %73 = arith.mulf %72, %66 : vector<2x1x8xf32>
    %74 = vector.broadcast %73 : vector<2x1x8xf32> to vector<2x8x8xf32>
    %75 = arith.addf %71, %74 : vector<2x8x8xf32>
    %cst_27 = arith.constant dense<0xFF800000> : vector<2x8xf32>
    %76 = vector.multi_reduction <maximumf>, %75, %cst_27 [2] : vector<2x8x8xf32> to vector<2x8xf32>
    %77 = vector.shape_cast %76 : vector<2x8xf32> to vector<2x8x1xf32>
    %78 = vector.broadcast %77 : vector<2x8x1xf32> to vector<2x8x8xf32>
    %79 = arith.subf %75, %78 : vector<2x8x8xf32>
    %80 = math.exp %79 : vector<2x8x8xf32>
    %cst_28 = arith.constant dense<0.000000e+00> : vector<2x8xf32>
    %81 = vector.multi_reduction <add>, %80, %cst_28 [2] : vector<2x8x8xf32> to vector<2x8xf32>
    %82 = vector.shape_cast %81 : vector<2x8xf32> to vector<2x8x1xf32>
    %83 = tpu.reciprocal %82 {approx = true} : vector<2x8x1xf32> -> vector<2x8x1xf32>
    %84 = vector.broadcast %83 : vector<2x8x1xf32> to vector<2x8x8xf32>
    %85 = arith.mulf %80, %84 : vector<2x8x8xf32>
    %c0_29 = arith.constant 0 : index
    %c0_30 = arith.constant 0 : index
    %c0_31 = arith.constant 0 : index
    %86 = vector.load %arg3[%c0_29, %c0_30, %c0_31] : memref<1x8x8xf32, #tpu.memory_space<vmem>>, vector<1x8x8xf32>
    %87 = vector.broadcast %54 : vector<1x1x1xf32> to vector<2x8x8xf32>
    %88 = arith.mulf %87, %85 : vector<2x8x8xf32>
    %89 = vector.broadcast %86 : vector<1x8x8xf32> to vector<2x8x8xf32>
    %90 = arith.addf %89, %88 : vector<2x8x8xf32>
    %91 = arith.truncf %90 : vector<2x8x8xf32> to vector<2x8x8xbf16>
    %92 = arith.truncf %43 : vector<2x8x32xf32> to vector<2x8x32xbf16>
    "tpu.trace_start"() <{level = 10 : i32, message = "bnm,bmd->bnd"}> : () -> ()
    %cst_32 = arith.constant dense<0.000000e+00> : vector<2x8x32xf32>
    %93 = tpu.matmul %91, %92, %cst_32 {dimension_numbers = #tpu.dot_dimension_numbers<[2], [1], [1], [2], [0, 0, 0, 1, 1, 2], [0], [0]>} : vector<2x8x8xbf16>, vector<2x8x32xbf16>, vector<2x8x32xf32> -> vector<2x8x32xf32>
    "tpu.trace_stop"() : () -> ()
    %94 = vector.shape_cast %93 : vector<2x8x32xf32> to vector<16x32xf32>
    %95 = arith.truncf %94 : vector<16x32xf32> to vector<16x32xbf16>
    %c0_33 = arith.constant 0 : index
    %c0_34 = arith.constant 0 : index
    %c0_35 = arith.constant 0 : index
    %96 = vector.load %arg4[%c0_33, %c0_34, %c0_35] : memref<1x32x32xbf16, #tpu.memory_space<vmem>>, vector<1x32x32xbf16>
    %97 = vector.shape_cast %96 : vector<1x32x32xbf16> to vector<32x32xbf16>
    %cst_36 = arith.constant dense<0.000000e+00> : vector<16x32xf32>
    %98 = tpu.matmul %95, %97, %cst_36 {dimension_numbers = #tpu.dot_dimension_numbers<[1], [0], [0], [1], [0, 0, 1, 1], [], []>} : vector<16x32xbf16>, vector<32x32xbf16>, vector<16x32xf32> -> vector<16x32xf32>
    %99 = vector.broadcast %49 : vector<1x32xf32> to vector<16x32xf32>
    %100 = arith.addf %98, %99 : vector<16x32xf32>
    %cst_37 = arith.constant 0.000000e+00 : f32
    %101 = vector.broadcast %cst_37 : f32 to vector<16x32xf32>
    %102 = arith.maximumf %100, %101 : vector<16x32xf32>
    %103 = arith.truncf %102 : vector<16x32xf32> to vector<16x32xbf16>
    %c0_38 = arith.constant 0 : index
    %c0_39 = arith.constant 0 : index
    %c0_40 = arith.constant 0 : index
    %104 = vector.load %arg5[%c0_38, %c0_39, %c0_40] : memref<1x32x32xbf16, #tpu.memory_space<vmem>>, vector<1x32x32xbf16>
    %105 = vector.shape_cast %104 : vector<1x32x32xbf16> to vector<32x32xbf16>
    %cst_41 = arith.constant dense<0.000000e+00> : vector<16x32xf32>
    %106 = tpu.matmul %103, %105, %cst_41 {dimension_numbers = #tpu.dot_dimension_numbers<[1], [0], [0], [1], [0, 0, 1, 1], [], []>} : vector<16x32xbf16>, vector<32x32xbf16>, vector<16x32xf32> -> vector<16x32xf32>
    %107 = vector.broadcast %51 : vector<1x32xf32> to vector<16x32xf32>
    %108 = arith.addf %106, %107 : vector<16x32xf32>
    %109 = vector.shape_cast %108 : vector<16x32xf32> to vector<2x8x32xf32>
    %c0_42 = arith.constant 0 : index
    %c0_43 = arith.constant 0 : index
    %c0_44 = arith.constant 0 : index
    %110 = vector.load %arg7[%c0_42, %c0_43, %c0_44] : memref<1x8x3xf32, #tpu.memory_space<vmem>>, vector<1x8x1xf32>
    %111 = vector.shape_cast %110 : vector<1x8x1xf32> to vector<8x1xf32>
    %112 = vector.shape_cast %111 : vector<8x1xf32> to vector<1x8x1xf32>
    %c0_45 = arith.constant 0 : index
    %c0_46 = arith.constant 0 : index
    %c1_47 = arith.constant 1 : index
    %113 = vector.load %arg7[%c0_45, %c0_46, %c1_47] : memref<1x8x3xf32, #tpu.memory_space<vmem>>, vector<1x8x1xf32>
    %114 = vector.shape_cast %113 : vector<1x8x1xf32> to vector<8x1xf32>
    %115 = vector.shape_cast %114 : vector<8x1xf32> to vector<1x8x1xf32>
    %c0_48 = arith.constant 0 : index
    %c0_49 = arith.constant 0 : index
    %c2_50 = arith.constant 2 : index
    %116 = vector.load %arg7[%c0_48, %c0_49, %c2_50] : memref<1x8x3xf32, #tpu.memory_space<vmem>>, vector<1x8x1xf32>
    %117 = vector.shape_cast %116 : vector<1x8x1xf32> to vector<8x1xf32>
    %118 = vector.shape_cast %117 : vector<8x1xf32> to vector<1x8x1xf32>
    %119 = vector.broadcast %112 : vector<1x8x1xf32> to vector<2x8x32xf32>
    %120 = arith.mulf %119, %43 : vector<2x8x32xf32>
    %121 = vector.broadcast %115 : vector<1x8x1xf32> to vector<2x8x32xf32>
    %122 = arith.mulf %121, %93 : vector<2x8x32xf32>
    %123 = arith.addf %120, %122 : vector<2x8x32xf32>
    %124 = vector.broadcast %118 : vector<1x8x1xf32> to vector<2x8x32xf32>
    %125 = arith.mulf %124, %109 : vector<2x8x32xf32>
    %126 = arith.addf %123, %125 : vector<2x8x32xf32>
    %127 = arith.mulf %126, %126 : vector<2x8x32xf32>
    %cst_51 = arith.constant dense<0.000000e+00> : vector<2x8xf32>
    %128 = vector.multi_reduction <add>, %127, %cst_51 [2] : vector<2x8x32xf32> to vector<2x8xf32>
    %129 = arith.cmpf olt, %47, %128 : vector<2x8xf32>
    %130 = vector.shape_cast %129 : vector<2x8xi1> to vector<2x8x1xi1>
    %131 = vector.shape_cast %130 : vector<2x8x1xi1> to vector<2x8x1xi1>
    %132 = vector.broadcast %131 : vector<2x8x1xi1> to vector<2x8x32xi1>
    %133 = arith.select %132, %43, %126 : vector<2x8x32xi1>, vector<2x8x32xf32>
    %c0_52 = arith.constant 0 : index
    %c0_53 = arith.constant 0 : index
    %c0_54 = arith.constant 0 : index
    %134 = vector.load %arg8[%c0_52, %c0_53, %c0_54] : memref<2x8x32xf32, #tpu.memory_space<vmem>>, vector<2x8x32xf32>
    tpu.vector_store %arg8[%c0_52, %c0_53, %c0_54], %133 {strides = array<i32>} : memref<2x8x32xf32, #tpu.memory_space<vmem>>, vector<2x8x32xf32>,
    %135 = arith.select %129, %47, %128 : vector<2x8xi1>, vector<2x8xf32>
    %c0_55 = arith.constant 0 : index
    %c0_56 = arith.constant 0 : index
    %136 = vector.load %arg10[%c0_55, %c0_56] : memref<2x8xf32, #tpu.memory_space<vmem>>, vector<2x8xf32>
    tpu.vector_store %arg10[%c0_55, %c0_56], %135 {strides = array<i32>} : memref<2x8xf32, #tpu.memory_space<vmem>>, vector<2x8xf32>,
    return
  }
  func.func @transform_0(%arg0: i32, %arg1: i32) -> (i32, i32, i32) {
    %c0_i32 = arith.constant 0 : i32
    %c0_i32_0 = arith.constant 0 : i32
    %c0_i32_1 = arith.constant 0 : i32
    return %arg0, %c0_i32, %c0_i32_0 : i32, i32, i32
  }
  func.func @transform_1(%arg0: i32, %arg1: i32) -> (i32, i32, i32) {
    %c0_i32 = arith.constant 0 : i32
    %c0_i32_0 = arith.constant 0 : i32
    %c0_i32_1 = arith.constant 0 : i32
    return %arg1, %c0_i32, %c0_i32_0 : i32, i32, i32
  }
  func.func @transform_2(%arg0: i32, %arg1: i32) -> (i32, i32, i32) {
    %c0_i32 = arith.constant 0 : i32
    %c0_i32_0 = arith.constant 0 : i32
    %c0_i32_1 = arith.constant 0 : i32
    return %arg1, %c0_i32, %c0_i32_0 : i32, i32, i32
  }
  func.func @transform_3(%arg0: i32, %arg1: i32) -> (i32, i32, i32) {
    %c0_i32 = arith.constant 0 : i32
    %c0_i32_0 = arith.constant 0 : i32
    %c0_i32_1 = arith.constant 0 : i32
    return %arg1, %c0_i32, %c0_i32_0 : i32, i32, i32
  }
  func.func @transform_4(%arg0: i32, %arg1: i32) -> (i32, i32, i32) {
    %c0_i32 = arith.constant 0 : i32
    %c0_i32_0 = arith.constant 0 : i32
    %c0_i32_1 = arith.constant 0 : i32
    return %arg1, %c0_i32, %c0_i32_0 : i32, i32, i32
  }
  func.func @transform_5(%arg0: i32, %arg1: i32) -> (i32, i32, i32) {
    %c0_i32 = arith.constant 0 : i32
    %c0_i32_0 = arith.constant 0 : i32
    %c0_i32_1 = arith.constant 0 : i32
    return %arg1, %c0_i32, %c0_i32_0 : i32, i32, i32
  }
  func.func @transform_6(%arg0: i32, %arg1: i32) -> (i32, i32, i32) {
    %c0_i32 = arith.constant 0 : i32
    %c0_i32_0 = arith.constant 0 : i32
    %c0_i32_1 = arith.constant 0 : i32
    return %arg0, %c0_i32, %c0_i32_0 : i32, i32, i32
  }
  func.func @transform_7(%arg0: i32, %arg1: i32) -> (i32, i32) {
    %c0_i32 = arith.constant 0 : i32
    %c0_i32_0 = arith.constant 0 : i32
    return %arg0, %c0_i32 : i32, i32
  }
}

</mosaic_0001>

<llo_original>
// kernel: _b2opt_call.1
$region0: #{_b2opt_call.1}
  #allocation0 [shape = 'u32[]', space=smem, size = 0x4, offset = 0x4, fixed_abs, tag = 'smem constant byte address 0x4 - core index']
  #allocation1 [shape = 'u32[144,128]{1,0:T(1,128)}', space=vmem, size = 0x12000, scoped, tag = 'internal scratch']
  #allocation2 [shape = 'f32[2,8]{1,0:T(2,128)}', space=vmem, size = 0x400, scoped, tag = 'scratch operand']
  %s0 = inlined_call_operand.hbm [shape: f32[2,8,32], index: 0, kind: input, shape index: {}, may-alias: {0,6}]
  %s1 = inlined_call_operand.vmem [shape: f32[3,8,8], index: 1, kind: input, shape index: {}]
  %s2 = inlined_call_operand.vmem [shape: bf16[3,32,32], index: 2, kind: input, shape index: {}]
  %s3 = inlined_call_operand.hbm [shape: bf16[3,32,32], index: 3, kind: input, shape index: {}]
  %s4 = inlined_call_operand.hbm [shape: f32[3,3,32], index: 4, kind: input, shape index: {}]
  %s5 = inlined_call_operand.vmem [shape: f32[3,8,3], index: 5, kind: input, shape index: {}]
  %s6 = inlined_call_operand.hbm [shape: f32[2,8,32], index: 6, kind: output, shape index: {0}, may-alias: {0,6}]
  %s7 = inlined_call_operand.hbm [shape: f32[2,3], index: 7, kind: output, shape index: {1}]
  %8 = xla_tuple %s6, %s7
  %s9 = sld [smem:[#allocation0]]
  $region81: #{_b2opt_call.1} parent=0
    _
  %s11 = ssub.s32 1, %s9
  %s12 = scalar_select 0, %s11, %s9
  $region1: #{_b2opt_call.1} parent=0
    #allocation3 [shape = 'u8[8192]{0}', space=vmem, size = 0x2000, scoped, tag = 'input window, operand 0, single buffered']
    #allocation4 [shape = 's32[2]{0}', space=sflag, size = 0x8, scoped, tag = 'scoped memory for _b2opt_call.1']
    #allocation5 [shape = 's32[2]{0}', space=sflag, size = 0x8, scoped, tag = 'scoped memory for _b2opt_call.1']
    #allocation6 [shape = 'u8[16384]{0}', space=vmem, size = 0x4000, scoped, tag = 'input window, operand 3']
    #allocation7 [shape = 's32[2]{0}', space=sflag, size = 0x8, scoped, tag = 'scoped memory for _b2opt_call.1']
    #allocation8 [shape = 'u8[4096]{0}', space=vmem, size = 0x1000, scoped, tag = 'input window, operand 4']
    #allocation9 [shape = 'u8[8192]{0}', space=vmem, size = 0x2000, scoped, tag = 'output window, operand 0, single buffered']
    #allocation10 [shape = 'u8[1024]{0}', space=vmem, size = 0x400, scoped, tag = 'output window, operand 1, single buffered']
    #allocation11 [shape = 's32[1]{0}', space=sflag, size = 0x4, scoped, tag = 'scoped memory for _b2opt_call.1']
    %13 = vsyncpa [#allocation4], 0
    %14 = vsyncpa [#allocation7], 0
    %s15 = scalar_lea.sflag [#allocation7], 1
    %16 = vsyncpa %s15, 0
    %17 = vsyncpa [#allocation5], 0
    %18 = vsyncpa [#allocation11], 0
    loop: start=0, step=1, limit=5
    $region2: #{_b2opt_call.1} parent=1 // loop_pre_header
      _
    $region3: #{_b2opt_call.1} parent=1 // loop_header
      %s20 = sphi 0, %s24
      %p21 = scmp.ge.s32.totalorder %s20, 5
      %s27 = sphi 0, %s39
      %s28 = sphi 0, %s35
      %s29 = sphi 0, %s27
      %s30 = sphi 0, %s28
      %s31 = sphi 0, %s29
      %s32 = sphi 0, %s30
      %s42 = sphi 0, %s44
      %s45 = sphi 0, %s42
      %s46 = sphi 0, %s45
      %s62 = sphi 0, %s46
      %s68 = sphi 0, %s70
      %s71 = sphi 0, %s68
      %s72 = sphi 0, %s71
      %s88 = sphi 0, %s72
      %s94 = sphi 0, %s96
      %s97 = sphi 0, %s94
      %s98 = sphi 0, %s97
      %s114 = sphi 0, %s98
      %s120 = sphi 0, %s122
      %s123 = sphi 0, %s120
      %s124 = sphi 0, %s123
      %s140 = sphi 0, %s124
      %s146 = sphi 0, %s148
      %s149 = sphi 0, %s146
      %s150 = sphi 0, %s149
      %s166 = sphi 0, %s150
      %s172 = sphi 0, %s174
      %s175 = sphi 0, %s172
      %s176 = sphi 0, %s175
      %s192 = sphi 0, %s176
      %s198 = sphi 0, %s200
      %s201 = sphi 0, %s198
      %s202 = sphi 0, %s201
      %s218 = sphi 0, %s202
      %s224 = sphi 0, %s226
      %s227 = sphi 0, %s224
      %s228 = sphi 0, %s227
      %s244 = sphi 0, %s228
    $region4: #{_b2opt_call.1} parent=1 // loop_header_branch
      %23 = sbr.rel (%p21) target = $region8
    $region5: #{_b2opt_call.1} parent=1 // loop_body
      %s25 = ssub.s32 %s20, 1
      %s26 = ssub.s32 %s20, 2
      %s33 = sadd.s32 1, %s28
      %p34 = scmp.ge.s32.totalorder %s33, 3
      %s35 = scalar_select %p34, 0, %s33
      %s36 = sadd.s32 1, %s27
      %s37 = scalar_select %p34, %s36, %s27
      %p38 = scmp.ge.s32.totalorder %s37, 1
      %s39 = scalar_select %p38, 0, %s37
      %s40 = ssub.s32 %s27, %s39
      %p41 = scmp.eq.s32.totalorder %s40, 0
      %s43 = sadd.s32 %s42, 1
      %s44 = scalar_select %p41, %s42, %s43
      %p47 = pneg %p41
      %p48 = scmp.eq.s32.totalorder %s20, 2
      %p49 = por %p47, %p48
      %p50 = scmp.ne.s32.totalorder %s42, %s45
      %p51 = scmp.eq.s32.totalorder %s20, 0
      %p52 = por %p50, %p51
      %p53 = scmp.ne.s32.totalorder %s42, %s45
      %p54 = scmp.eq.s32.totalorder %s25, 2
      %p55 = por %p53, %p54
      %p56 = scmp.ne.s32.totalorder %s45, %s46
      %p57 = scmp.eq.s32.totalorder %s25, 0
      %p58 = por %p56, %p57
      %p59 = scmp.ne.s32.totalorder %s45, %s46
      %p60 = scmp.eq.s32.totalorder %s26, 2
      %p61 = por %p59, %p60
      %p63 = scmp.ne.s32.totalorder %s46, %s62
      %p64 = scmp.eq.s32.totalorder %s26, 0
      %p65 = por %p63, %p64
      %s66 = ssub.s32 %s28, %s35
      %p67 = scmp.eq.s32.totalorder %s66, 0
      %s69 = sadd.s32 %s68, 1
      %s70 = scalar_select %p67, %s68, %s69
      %p73 = pneg %p67
      %p74 = scmp.eq.s32.totalorder %s20, 2
      %p75 = por %p73, %p74
      %p76 = scmp.ne.s32.totalorder %s68, %s71
      %p77 = scmp.eq.s32.totalorder %s20, 0
      %p78 = por %p76, %p77
      %p79 = scmp.ne.s32.totalorder %s68, %s71
      %p80 = scmp.eq.s32.totalorder %s25, 2
      %p81 = por %p79, %p80
      %p82 = scmp.ne.s32.totalorder %s71, %s72
      %p83 = scmp.eq.s32.totalorder %s25, 0
      %p84 = por %p82, %p83
      %p85 = scmp.ne.s32.totalorder %s71, %s72
      %p86 = scmp.eq.s32.totalorder %s26, 2
      %p87 = por %p85, %p86
      %p89 = scmp.ne.s32.totalorder %s72, %s88
      %p90 = scmp.eq.s32.totalorder %s26, 0
      %p91 = por %p89, %p90
      %s92 = ssub.s32 %s28, %s35
      %p93 = scmp.eq.s32.totalorder %s92, 0
      %s95 = sadd.s32 %s94, 1
      %s96 = scalar_select %p93, %s94, %s95
      %p99 = pneg %p93
      %p100 = scmp.eq.s32.totalorder %s20, 2
      %p101 = por %p99, %p100
      %p102 = scmp.ne.s32.totalorder %s94, %s97
      %p103 = scmp.eq.s32.totalorder %s20, 0
      %p104 = por %p102, %p103
      %p105 = scmp.ne.s32.totalorder %s94, %s97
      %p106 = scmp.eq.s32.totalorder %s25, 2
      %p107 = por %p105, %p106
      %p108 = scmp.ne.s32.totalorder %s97, %s98
      %p109 = scmp.eq.s32.totalorder %s25, 0
      %p110 = por %p108, %p109
      %p111 = scmp.ne.s32.totalorder %s97, %s98
      %p112 = scmp.eq.s32.totalorder %s26, 2
      %p113 = por %p111, %p112
      %p115 = scmp.ne.s32.totalorder %s98, %s114
      %p116 = scmp.eq.s32.totalorder %s26, 0
      %p117 = por %p115, %p116
      %s118 = ssub.s32 %s28, %s35
      %p119 = scmp.eq.s32.totalorder %s118, 0
      %s121 = sadd.s32 %s120, 1
      %s122 = scalar_select %p119, %s120, %s121
      %p125 = pneg %p119
      %p126 = scmp.eq.s32.totalorder %s20, 2
      %p127 = por %p125, %p126
      %p128 = scmp.ne.s32.totalorder %s120, %s123
      %p129 = scmp.eq.s32.totalorder %s20, 0
      %p130 = por %p128, %p129
      %p131 = scmp.ne.s32.totalorder %s120, %s123
      %p132 = scmp.eq.s32.totalorder %s25, 2
      %p133 = por %p131, %p132
      %p134 = scmp.ne.s32.totalorder %s123, %s124
      %p135 = scmp.eq.s32.totalorder %s25, 0
      %p136 = por %p134, %p135
      %p137 = scmp.ne.s32.totalorder %s123, %s124
      %p138 = scmp.eq.s32.totalorder %s26, 2
      %p139 = por %p137, %p138
      %p141 = scmp.ne.s32.totalorder %s124, %s140
      %p142 = scmp.eq.s32.totalorder %s26, 0
      %p143 = por %p141, %p142
      %s144 = ssub.s32 %s28, %s35
      %p145 = scmp.eq.s32.totalorder %s144, 0
      %s147 = sadd.s32 %s146, 1
      %s148 = scalar_select %p145, %s146, %s147
      %p151 = pneg %p145
      %p152 = scmp.eq.s32.totalorder %s20, 2
      %p153 = por %p151, %p152
      %p154 = scmp.ne.s32.totalorder %s146, %s149
      %p155 = scmp.eq.s32.totalorder %s20, 0
      %p156 = por %p154, %p155
      %p157 = scmp.ne.s32.totalorder %s146, %s149
      %p158 = scmp.eq.s32.totalorder %s25, 2
      %p159 = por %p157, %p158
      %p160 = scmp.ne.s32.totalorder %s149, %s150
      %p161 = scmp.eq.s32.totalorder %s25, 0
      %p162 = por %p160, %p161
      %p163 = scmp.ne.s32.totalorder %s149, %s150
      %p164 = scmp.eq.s32.totalorder %s26, 2
      %p165 = por %p163, %p164
      %p167 = scmp.ne.s32.totalorder %s150, %s166
      %p168 = scmp.eq.s32.totalorder %s26, 0
      %p169 = por %p167, %p168
      %s170 = ssub.s32 %s28, %s35
      %p171 = scmp.eq.s32.totalorder %s170, 0
      %s173 = sadd.s32 %s172, 1
      %s174 = scalar_select %p171, %s172, %s173
      %p177 = pneg %p171
      %p178 = scmp.eq.s32.totalorder %s20, 2
      %p179 = por %p177, %p178
      %p180 = scmp.ne.s32.totalorder %s172, %s175
      %p181 = scmp.eq.s32.totalorder %s20, 0
      %p182 = por %p180, %p181
      %p183 = scmp.ne.s32.totalorder %s172, %s175
      %p184 = scmp.eq.s32.totalorder %s25, 2
      %p185 = por %p183, %p184
      %p186 = scmp.ne.s32.totalorder %s175, %s176
      %p187 = scmp.eq.s32.totalorder %s25, 0
      %p188 = por %p186, %p187
      %p189 = scmp.ne.s32.totalorder %s175, %s176
      %p190 = scmp.eq.s32.totalorder %s26, 2
      %p191 = por %p189, %p190
      %p193 = scmp.ne.s32.totalorder %s176, %s192
      %p194 = scmp.eq.s32.totalorder %s26, 0
      %p195 = por %p193, %p194
      %s196 = ssub.s32 %s27, %s39
      %p197 = scmp.eq.s32.totalorder %s196, 0
      %s199 = sadd.s32 %s198, 1
      %s200 = scalar_select %p197, %s198, %s199
      %p203 = pneg %p197
      %p204 = scmp.eq.s32.totalorder %s20, 2
      %p205 = por %p203, %p204
      %p206 = scmp.ne.s32.totalorder %s198, %s201
      %p207 = scmp.eq.s32.totalorder %s20, 0
      %p208 = por %p206, %p207
      %p209 = scmp.ne.s32.totalorder %s198, %s201
      %p210 = scmp.eq.s32.totalorder %s25, 2
      %p211 = por %p209, %p210
      %p212 = scmp.ne.s32.totalorder %s201, %s202
      %p213 = scmp.eq.s32.totalorder %s25, 0
      %p214 = por %p212, %p213
      %p215 = scmp.ne.s32.totalorder %s201, %s202
      %p216 = scmp.eq.s32.totalorder %s26, 2
      %p217 = por %p215, %p216
      %p219 = scmp.ne.s32.totalorder %s202, %s218
      %p220 = scmp.eq.s32.totalorder %s26, 0
      %p221 = por %p219, %p220
      %s222 = ssub.s32 %s27, %s39
      %p223 = scmp.eq.s32.totalorder %s222, 0
      %s225 = sadd.s32 %s224, 1
      %s226 = scalar_select %p223, %s224, %s225
      %p229 = pneg %p223
      %p230 = scmp.eq.s32.totalorder %s20, 2
      %p231 = por %p229, %p230
      %p232 = scmp.ne.s32.totalorder %s224, %s227
      %p233 = scmp.eq.s32.totalorder %s20, 0
      %p234 = por %p232, %p233
      %p235 = scmp.ne.s32.totalorder %s224, %s227
      %p236 = scmp.eq.s32.totalorder %s25, 2
      %p237 = por %p235, %p236
      %p238 = scmp.ne.s32.totalorder %s227, %s228
      %p239 = scmp.eq.s32.totalorder %s25, 0
      %p240 = por %p238, %p239
      %p241 = scmp.ne.s32.totalorder %s227, %s228
      %p242 = scmp.eq.s32.totalorder %s26, 2
      %p243 = por %p241, %p242
      %p245 = scmp.ne.s32.totalorder %s228, %s244
      %p246 = scmp.eq.s32.totalorder %s26, 0
      %p247 = por %p245, %p246
      %p248 = scmp.le.s32.totalorder 1, %s20
      %p249 = scmp.lt.s32.totalorder %s20, 4
      %p250 = pnand %p248, %p249
      %p251 = pneg %p250
      // Predicated region
      $region9: #{_b2opt_call.1} parent=5 // pred_check
        _
      $region10: #{_b2opt_call.1} parent=5 // pred_check_branch
        %253 = sbr.rel (%p250) target = $region12
      $region11: #{_b2opt_call.1} parent=5 // pred_region
        %s254 = ssub.s32 %s20, 1
        // Predicated region
        $region13: #{_b2opt_call.1} parent=11 // pred_check
          %p255 = pneg %p58
        $region14: #{_b2opt_call.1} parent=11 // pred_check_branch
          %257 = sbr.rel (%p255) target = $region16
        $region15: #{_b2opt_call.1} parent=11 // pred_region
          %s258 = smul.u32 2, %s29
          %s260 = ssub.s32 256, 256
          %261 = vsyncadd [#allocation4], %s260
          %s262 = smul.addr %s258, 128
          %s263 = scalar_lea.hbm %s0, %s262
          %s264 = sshll.u32 [#allocation3], 4
          %s265 = int_to_ptr.vmem [resolvable:$true] %s264
          %270 = dma.hbm_to_vmem [thread:$0]  %s263, 256, %s265, [#allocation4], 128, 128, 8
        $region16: #{_b2opt_call.1} parent=11 // pred_fallthru
          _
      $region12: #{_b2opt_call.1} parent=5 // pred_fallthru
        _
      %p271 = scmp.lt.s32.totalorder %s20, 3
      // Predicated region
      $region17: #{_b2opt_call.1} parent=5 // pred_check
        %p272 = pneg %p271
      $region18: #{_b2opt_call.1} parent=5 // pred_check_branch
        %274 = sbr.rel (%p272) target = $region20
      $region19: #{_b2opt_call.1} parent=5 // pred_region
        // Predicated region
        $region21: #{_b2opt_call.1} parent=19 // pred_check
          %p275 = pneg %p78
        $region22: #{_b2opt_call.1} parent=19 // pred_check_branch
          %277 = sbr.rel (%p275) target = $region24
        $region23: #{_b2opt_call.1} parent=19 // pred_region
          %p278 = scmp.lt.s32.totalorder %s28, 2
          %s279 = scalar_select %p278, %s28, 2
          %s280 = smul.addr %s279, 8
          %s281 = scalar_lea.vmem %s1, %s280
        $region24: #{_b2opt_call.1} parent=19 // pred_fallthru
          _
        // Predicated region
        $region25: #{_b2opt_call.1} parent=19 // pred_check
          %p282 = pneg %p104
        $region26: #{_b2opt_call.1} parent=19 // pred_check_branch
          %284 = sbr.rel (%p282) target = $region28
        $region27: #{_b2opt_call.1} parent=19 // pred_region
          %p285 = scmp.lt.s32.totalorder %s28, 2
          %s286 = scalar_select %p285, %s28, 2
          %s287 = smul.addr %s286, 4
          %s288 = smul.addr %s287, 4
          %s289 = scalar_lea.vmem %s2, %s288
        $region28: #{_b2opt_call.1} parent=19 // pred_fallthru
          _
        // Predicated region
        $region29: #{_b2opt_call.1} parent=19 // pred_check
          %p290 = pneg %p130
        $region30: #{_b2opt_call.1} parent=19 // pred_check_branch
          %292 = sbr.rel (%p290) target = $region32
        $region31: #{_b2opt_call.1} parent=19 // pred_region
          %s293 = sand.u32 %s20, 1
          %s294 = scalar_lea.sflag [#allocation7], %s293
          %s295 = sand.u32 %s120, 1
          %s296 = smul.addr %s295, 16
          %s297 = scalar_lea.vmem [#allocation6], %s296
          %s299 = ssub.s32 256, 256
          %300 = vsyncadd %s294, %s299
          %s301 = smul.addr %s28, 4
          %s302 = smul.addr %s301, 64
          %s303 = scalar_lea.hbm %s3, %s302
          %s304 = sshll.u32 %s297, 4
          %s305 = int_to_ptr.vmem [resolvable:$true] %s304
          %310 = dma.hbm_to_vmem [thread:$0]  %s303, 256, %s305, %s294, 64, 64, 4
        $region32: #{_b2opt_call.1} parent=19 // pred_fallthru
          _
        // Predicated region
        $region33: #{_b2opt_call.1} parent=19 // pred_check
          %p311 = pneg %p156
        $region34: #{_b2opt_call.1} parent=19 // pred_check_branch
          %313 = sbr.rel (%p311) target = $region36
        $region35: #{_b2opt_call.1} parent=19 // pred_region
          %s314 = sand.u32 %s20, 1
          %s315 = scalar_lea.sflag [#allocation7], %s314
          %s316 = sand.u32 %s146, 1
          %s317 = smul.addr %s316, 4
          %s318 = scalar_lea.vmem [#allocation8], %s317
          %s320 = ssub.s32 64, 64
          %321 = vsyncadd %s315, %s320
          %s322 = smul.addr %s28, 64
          %s323 = scalar_lea.hbm %s4, %s322
          %s325 = sshll.u32 %s318, 4
          %s326 = int_to_ptr.vmem [resolvable:$true] %s325
          %328 = dma.hbm_to_vmem [thread:$0]  %s323, 64, %s326, %s315
        $region36: #{_b2opt_call.1} parent=19 // pred_fallthru
          _
        // Predicated region
        $region37: #{_b2opt_call.1} parent=19 // pred_check
          %p329 = pneg %p182
        $region38: #{_b2opt_call.1} parent=19 // pred_check_branch
          %331 = sbr.rel (%p329) target = $region40
        $region39: #{_b2opt_call.1} parent=19 // pred_region
          %p332 = scmp.lt.s32.totalorder %s28, 2
          %s333 = scalar_select %p332, %s28, 2
          %s334 = smul.addr %s333, 8
          %s335 = scalar_lea.vmem %s5, %s334
        $region40: #{_b2opt_call.1} parent=19 // pred_fallthru
          _
      $region20: #{_b2opt_call.1} parent=5 // pred_fallthru
        _
      %p336 = scmp.le.s32.totalorder 1, %s20
      %p337 = scmp.lt.s32.totalorder %s20, 4
      %p338 = pnand %p336, %p337
      %p339 = pneg %p338
      // Predicated region
      $region41: #{_b2opt_call.1} parent=5 // pred_check
        _
      $region42: #{_b2opt_call.1} parent=5 // pred_check_branch
        %341 = sbr.rel (%p338) target = $region44
      $region43: #{_b2opt_call.1} parent=5 // pred_region
        %s342 = ssub.s32 %s20, 1
        // Predicated region
        $region45: #{_b2opt_call.1} parent=43 // pred_check
          %p343 = pneg %p58
        $region46: #{_b2opt_call.1} parent=43 // pred_check_branch
          %345 = sbr.rel (%p343) target = $region48
        $region47: #{_b2opt_call.1} parent=43 // pred_region
          %346 = dma.done [#allocation4], 256
        $region48: #{_b2opt_call.1} parent=43 // pred_fallthru
          _
        %s347 = sand.u32 %s25, 1
        %s348 = scalar_lea.sflag [#allocation7], %s347
        %s349 = sand.u32 %s123, 1
        %s350 = smul.addr %s349, 16
        %s351 = scalar_lea.vmem [#allocation6], %s350
        // Predicated region
        $region49: #{_b2opt_call.1} parent=43 // pred_check
          %p352 = pneg %p136
        $region50: #{_b2opt_call.1} parent=43 // pred_check_branch
          %354 = sbr.rel (%p352) target = $region52
        $region51: #{_b2opt_call.1} parent=43 // pred_region
          %355 = dma.done %s348, 256
        $region52: #{_b2opt_call.1} parent=43 // pred_fallthru
          _
        %s356 = sand.u32 %s25, 1
        %s357 = scalar_lea.sflag [#allocation7], %s356
        %s358 = sand.u32 %s149, 1
        %s359 = smul.addr %s358, 4
        %s360 = scalar_lea.vmem [#allocation8], %s359
        // Predicated region
        $region53: #{_b2opt_call.1} parent=43 // pred_check
          %p361 = pneg %p162
        $region54: #{_b2opt_call.1} parent=43 // pred_check_branch
          %363 = sbr.rel (%p361) target = $region56
        $region55: #{_b2opt_call.1} parent=43 // pred_region
          %364 = dma.done %s357, 64
        $region56: #{_b2opt_call.1} parent=43 // pred_fallthru
          _
        %p365 = pneg %p58
        %p366 = pneg %p55
        %p367 = scmp.lt.s32.totalorder %s30, 2
        %s368 = scalar_select %p367, %s30, 2
        %s369 = smul.addr %s368, 8
        %s370 = scalar_lea.vmem %s1, %s369
        %p371 = pneg %p84
        %p372 = pneg %p81
        %p373 = scmp.lt.s32.totalorder %s30, 2
        %s374 = scalar_select %p373, %s30, 2
        %s375 = smul.addr %s374, 4
        %s376 = smul.addr %s375, 4
        %s377 = scalar_lea.vmem %s2, %s376
        %p378 = pneg %p110
        %p379 = pneg %p107
        %s380 = sand.u32 %s25, 1
        %s381 = scalar_lea.sflag [#allocation7], %s380
        %s382 = sand.u32 %s123, 1
        %s383 = smul.addr %s382, 16
        %s384 = scalar_lea.vmem [#allocation6], %s383
        %p385 = pneg %p136
        %p386 = pneg %p133
        %s387 = sand.u32 %s25, 1
        %s388 = scalar_lea.sflag [#allocation7], %s387
        %s389 = sand.u32 %s149, 1
        %s390 = smul.addr %s389, 4
        %s391 = scalar_lea.vmem [#allocation8], %s390
        %p392 = pneg %p162
        %p393 = pneg %p159
        %p394 = scmp.lt.s32.totalorder %s30, 2
        %s395 = scalar_select %p394, %s30, 2
        %s396 = smul.addr %s395, 8
        %s397 = scalar_lea.vmem %s5, %s396
        %p398 = pneg %p188
        %p399 = pneg %p185
        %p400 = pneg %p214
        %p401 = pneg %p211
        %p402 = pneg %p240
        %p403 = pneg %p237
        %s404 = smul.u32 2, %s29
        %p405 = scmp.lt.s32.totalorder %s30, 2
        %s406 = scalar_select %p405, %s30, 2
        %s407 = smul.addr %s406, 8
        %s408 = scalar_lea.vmem %s1, %s407
        %p409 = scmp.lt.s32.totalorder %s30, 2
        %s410 = scalar_select %p409, %s30, 2
        %s411 = smul.addr %s410, 4
        %s412 = smul.addr %s411, 4
        %s413 = scalar_lea.vmem %s2, %s412
        %p414 = scmp.lt.s32.totalorder %s30, 2
        %s415 = scalar_select %p414, %s30, 2
        %s416 = smul.addr %s415, 8
        %s417 = scalar_lea.vmem %s5, %s416
        %s418 = smul.u32 2, %s29
        %p420 = scmp.eq.s32.totalorder %s30, 0
        // Predicated region
        $region57: #{_b2opt_call.1} parent=43 // pred_check
          %p421 = pneg %p420
        $region58: #{_b2opt_call.1} parent=43 // pred_check_branch
          %423 = sbr.rel (%p421) target = $region60
        $region59: #{_b2opt_call.1} parent=43 // pred_region
          %v424 = vld [vmem:[#allocation3] sm:$0xff]
          %v425 = vld [vmem:[#allocation3 + $0x8] sm:$0xff]
          %vm426 = vcmask 261120
          %427 = vst.msk [vmem:[#allocation9] sm:$0xff] %vm426, %v424
          %428 = vst.msk [vmem:[#allocation9 + $0x8] sm:$0xff] %vm426, %v425
          %v429 = vmul.f32 %v424, %v424
          %v430 = vmul.f32 %v425, %v425
          %v431 = vsel %vm426, %v429, 0.0
          %432 = vadd.xlane.f32.xlu0 %v431
          %v433 = vpop.xlane.xlu0 %432
          %v434 = vsel %vm426, %v430, 0.0
          %435 = vadd.xlane.f32.xlu0 %v434
          %v436 = vpop.xlane.xlu0 %435
          %v439 = vlaneseq
          %v440 = vand.u32 %v439, 127
          %v441 = vlaneseq
          %v442 = vshrl.u32 %v441, 7
          %v443 = vsub.s32 %v440, %v442
          %v444 = vrot.slane %v433, %v443
          %v445 = vlaneseq
          %v446 = vshrl.u32 %v445, 7
          %v447 = vsub.s32 %v440, %v446
          %v448 = vrot.slane %v436, %v447
          %vm449 = vcmask 1041409
          %v450 = vsel %vm449, %v448, %v444
          %vm452 = vcmask 58368
          %453 = vst.msk [vmem:[#allocation2] sm:$0x3] %vm452, %v450
          %vm454 = vcmask 17408
          %455 = vst.msk [vmem:[#allocation10] sm:$0x3] %vm454, 0.0
        $region60: #{_b2opt_call.1} parent=43 // pred_fallthru
          _
        %v456 = vld [vmem:[#allocation9] sm:$0xff]
        %v457 = vld [vmem:[#allocation9 + $0x8] sm:$0xff]
        %v458 = vld [vmem:[#allocation2] sm:$0x3]
        %vm459 = vcmask 58368
        %v460 = vsel %vm459, %v458, inf
        %461 = vmin.xlane.f32.xlu0 %v460
        %v462 = vpop.xlane.xlu0 %461
        %v463 = vlaneseq
        %v464 = vand.u32 %v463, 127
        %v465 = vld [vmem:[#allocation10] sm:$0x3]
        %v466 = vstv %s30
        %vm467 = vcmp.eq.s32.totalorder %v464, %v466
        %v468 = vsel %vm467, 1, 0
        %v469 = vcvt.s32.f32 %v468
        %v470 = vmul.f32 %v462, %v469
        %v471 = vadd.f32 %v465, %v470
        %vm472 = vcmask 17408
        %473 = vst.msk [vmem:[#allocation10] sm:$0x3] %vm472, %v471
        %v474 = vlaneseq
        %v475 = vshrl.u32 %v474, 7
        %v476 = vlaneseq
        %v477 = vshrl.u32 %v476, 7
        %v478 = vsub.s32 0, %v477
        %v479 = vrot.slane %v458, %v478
        %481 = vbcast.lane.b32.xlu0 %v479, 256
        %v482 = vpop.permute.xlu0 %481
        %v483 = vlaneseq
        %v484 = vshrl.u32 %v483, 7
        %v485 = vsub.s32 1, %v484
        %v486 = vrot.slane %v458, %v485
        %488 = vbcast.lane.b32.xlu0 %v486, 256
        %v489 = vpop.permute.xlu0 %488
        %v492 = vunpack.c.l.s4 1966171168
        %v493 = vunpack.c.0.s8 %v492
        %v494 = vlaneseq
        %v495 = vshrl.u32 %v494, 7
        %v496 = vsub.s32 %v493, %v495
        %v497 = vrot.slane %v458, %v496
        %v498 = vcombine.high %v497, %v497
        %v500 = vunpack.c.l.s4 1966171168
        %v501 = vunpack.c.0.s8 %v500
        %v502 = vlaneseq
        %v503 = vshrl.u32 %v502, 7
        %v504 = vsub.s32 %v501, %v503
        %v505 = vrot.slane %v497, %v504
        %v507 = vunpack.c.l.s4 1966171168
        %v508 = vunpack.c.0.s8 %v507
        %v509 = vlaneseq
        %v510 = vshrl.u32 %v509, 7
        %v511 = vsub.s32 %v508, %v510
        %v512 = vrot.slane %v498, %v511
        %v513 = vlaneseq
        %v514 = vshrl.u32 %v513, 7
        %v515 = vsub.s32 0, %v514
        %v516 = vrot.slane %v505, %v515
        %v517 = vlaneseq
        %v518 = vshrl.u32 %v517, 7
        %v519 = vsub.s32 0, %v518
        %v520 = vrot.slane %v512, %v519
        %vm523 = vcmp.lt.f32.partialorder %v516, %v482
        %vm524 = vcmp.lt.f32.partialorder %v520, %v489
        %v525 = vsel %vm523, 1, 0
        %v526 = vsel %vm524, 1, 0
        %vm527 = vcmp.eq.f32.partialorder %v516, %v482
        %vm528 = vcmp.eq.f32.partialorder %v520, %v489
        %vm529 = vcmp.lt.s32.totalorder %v464, %v475
        %v530 = vsel %vm529, 1, 0
        %vm531 = vcmp.eq.s32.totalorder %v530, 1
        %vm532 = vmand %vm527, %vm531
        %vm533 = vmand %vm528, %vm531
        %v534 = vsel %vm532, 1, 0
        %v535 = vsel %vm533, 1, 0
        %v536 = vadd.s32 %v525, %v534
        %v537 = vadd.s32 %v526, %v535
        %vm538 = vcmask 64512
        %v539 = vsel %vm538, %v536, 0
        %v540 = vand.u32 %v539, 65535
        %v541 = vshrl.u32 %v539, 16
        %v542 = vcvt.s32.f32 %v540
        %v543 = vcvt.s32.f32 %v541
        %544 = vadd.xlane.f32.xlu0 %v542
        %v545 = vpop.xlane.xlu0 %544
        %546 = vadd.xlane.f32.xlu0 %v543
        %v547 = vpop.xlane.xlu0 %546
        %v548 = vcvt.f32.s32 %v545
        %v549 = vcvt.f32.s32 %v547
        %v550 = vshll.u32 %v549, 16
        %v551 = vadd.s32 %v550, %v548
        %v552 = vsel %vm538, %v537, 0
        %v553 = vand.u32 %v552, 65535
        %v554 = vshrl.u32 %v552, 16
        %v555 = vcvt.s32.f32 %v553
        %v556 = vcvt.s32.f32 %v554
        %557 = vadd.xlane.f32.xlu0 %v555
        %v558 = vpop.xlane.xlu0 %557
        %559 = vadd.xlane.f32.xlu0 %v556
        %v560 = vpop.xlane.xlu0 %559
        %v561 = vcvt.f32.s32 %v558
        %v562 = vcvt.f32.s32 %v560
        %v563 = vshll.u32 %v562, 16
        %v564 = vadd.s32 %v563, %v561
        %v565 = vlaneseq
        %v566 = vshrl.u32 %v565, 7
        %v567 = vsub.s32 0, %v566
        %v568 = vrot.slane %v475, %v567
        %v569 = vlaneseq
        %v570 = vshrl.u32 %v569, 7
        %v571 = vsub.s32 1, %v570
        %v572 = vrot.slane %v475, %v571
        %v573 = vlaneseq
        %v574 = vshrl.u32 %v573, 7
        %v575 = vsub.s32 2, %v574
        %v576 = vrot.slane %v475, %v575
        %v577 = vlaneseq
        %v578 = vshrl.u32 %v577, 7
        %v579 = vsub.s32 3, %v578
        %v580 = vrot.slane %v475, %v579
        %v581 = vlaneseq
        %v582 = vshrl.u32 %v581, 7
        %v583 = vsub.s32 4, %v582
        %v584 = vrot.slane %v475, %v583
        %v585 = vlaneseq
        %v586 = vshrl.u32 %v585, 7
        %v587 = vsub.s32 5, %v586
        %v588 = vrot.slane %v475, %v587
        %v589 = vlaneseq
        %v590 = vshrl.u32 %v589, 7
        %v591 = vsub.s32 6, %v590
        %v592 = vrot.slane %v475, %v591
        %v593 = vlaneseq
        %v594 = vshrl.u32 %v593, 7
        %v595 = vsub.s32 7, %v594
        %v596 = vrot.slane %v475, %v595
        %vm597 = vcmp.eq.s32.totalorder %v551, %v568
        %vm598 = vcmp.eq.s32.totalorder %v551, %v572
        %vm599 = vcmp.eq.s32.totalorder %v551, %v576
        %vm600 = vcmp.eq.s32.totalorder %v551, %v580
        %vm601 = vcmp.eq.s32.totalorder %v551, %v584
        %vm602 = vcmp.eq.s32.totalorder %v551, %v588
        %vm603 = vcmp.eq.s32.totalorder %v551, %v592
        %vm604 = vcmp.eq.s32.totalorder %v551, %v596
        %vm605 = vcmp.eq.s32.totalorder %v564, %v568
        %vm606 = vcmp.eq.s32.totalorder %v564, %v572
        %vm607 = vcmp.eq.s32.totalorder %v564, %v576
        %vm608 = vcmp.eq.s32.totalorder %v564, %v580
        %vm609 = vcmp.eq.s32.totalorder %v564, %v584
        %vm610 = vcmp.eq.s32.totalorder %v564, %v588
        %vm611 = vcmp.eq.s32.totalorder %v564, %v592
        %vm612 = vcmp.eq.s32.totalorder %v564, %v596
        %v613 = vsel %vm597, 1, 0
        %v614 = vsel %vm598, 1, 0
        %v615 = vsel %vm599, 1, 0
        %v616 = vsel %vm600, 1, 0
        %v617 = vsel %vm601, 1, 0
        %v618 = vsel %vm602, 1, 0
        %v619 = vsel %vm603, 1, 0
        %v620 = vsel %vm604, 1, 0
        %v621 = vsel %vm605, 1, 0
        %v622 = vsel %vm606, 1, 0
        %v623 = vsel %vm607, 1, 0
        %v624 = vsel %vm608, 1, 0
        %v625 = vsel %vm609, 1, 0
        %v626 = vsel %vm610, 1, 0
        %v627 = vsel %vm611, 1, 0
        %v628 = vsel %vm612, 1, 0
        %v629 = vcvt.s32.f32 %v613
        %v630 = vcvt.s32.f32 %v614
        %v631 = vcvt.s32.f32 %v615
        %v632 = vcvt.s32.f32 %v616
        %v633 = vcvt.s32.f32 %v617
        %v634 = vcvt.s32.f32 %v618
        %v635 = vcvt.s32.f32 %v619
        %v636 = vcvt.s32.f32 %v620
        %v637 = vcvt.s32.f32 %v621
        %v638 = vcvt.s32.f32 %v622
        %v639 = vcvt.s32.f32 %v623
        %v640 = vcvt.s32.f32 %v624
        %v641 = vcvt.s32.f32 %v625
        %v642 = vcvt.s32.f32 %v626
        %v643 = vcvt.s32.f32 %v627
        %v644 = vcvt.s32.f32 %v628
        %653 = vset.pattern.permute.xlu0 0
        %654 = vperm.xlu0 %653, %v629
        %v655 = vpop.permute.xlu0 %654
        %656 = vset.pattern.permute.xlu0 0
        %657 = vperm.xlu0 %656, %v630
        %v658 = vpop.permute.xlu0 %657
        %659 = vset.pattern.permute.xlu0 0
        %660 = vperm.xlu0 %659, %v631
        %v661 = vpop.permute.xlu0 %660
        %662 = vset.pattern.permute.xlu0 0
        %663 = vperm.xlu0 %662, %v632
        %v664 = vpop.permute.xlu0 %663
        %665 = vset.pattern.permute.xlu0 0
        %666 = vperm.xlu0 %665, %v633
        %v667 = vpop.permute.xlu0 %666
        %668 = vset.pattern.permute.xlu0 0
        %669 = vperm.xlu0 %668, %v634
        %v670 = vpop.permute.xlu0 %669
        %671 = vset.pattern.permute.xlu0 0
        %672 = vperm.xlu0 %671, %v635
        %v673 = vpop.permute.xlu0 %672
        %674 = vset.pattern.permute.xlu0 0
        %675 = vperm.xlu0 %674, %v636
        %v676 = vpop.permute.xlu0 %675
        %v677 = vlaneseq
        %v678 = vshrl.u32 %v677, 7
        %v679 = vsub.s32 %v464, %v678
        %v680 = vrot.slane %v655, %v679
        %v681 = vlaneseq
        %v682 = vshrl.u32 %v681, 7
        %v683 = vsub.s32 %v464, %v682
        %v684 = vrot.slane %v658, %v683
        %v685 = vlaneseq
        %v686 = vshrl.u32 %v685, 7
        %v687 = vsub.s32 %v464, %v686
        %v688 = vrot.slane %v661, %v687
        %v689 = vlaneseq
        %v690 = vshrl.u32 %v689, 7
        %v691 = vsub.s32 %v464, %v690
        %v692 = vrot.slane %v664, %v691
        %v693 = vlaneseq
        %v694 = vshrl.u32 %v693, 7
        %v695 = vsub.s32 %v464, %v694
        %v696 = vrot.slane %v667, %v695
        %v697 = vlaneseq
        %v698 = vshrl.u32 %v697, 7
        %v699 = vsub.s32 %v464, %v698
        %v700 = vrot.slane %v670, %v699
        %v701 = vlaneseq
        %v702 = vshrl.u32 %v701, 7
        %v703 = vsub.s32 %v464, %v702
        %v704 = vrot.slane %v673, %v703
        %v705 = vlaneseq
        %v706 = vshrl.u32 %v705, 7
        %v707 = vsub.s32 %v464, %v706
        %v708 = vrot.slane %v676, %v707
        %vm709 = vcmask 1041409
        %v710 = vsel %vm709, %v684, %v680
        %vm711 = vcmask 1042434
        %v712 = vsel %vm711, %v688, %v710
        %vm713 = vcmask 1043459
        %v714 = vsel %vm713, %v692, %v712
        %vm715 = vcmask 1044484
        %v716 = vsel %vm715, %v696, %v714
        %vm717 = vcmask 1045509
        %v718 = vsel %vm717, %v700, %v716
        %vm719 = vcmask 1046534
        %v720 = vsel %vm719, %v704, %v718
        %vm721 = vcmask 1047559
        %v722 = vsel %vm721, %v708, %v720
        %v723 = vsel %vm538, %v722, 0
        %725 = vmatprep.subr.mxu0 0.0
        %726 = vmatpush1.msra.mxu0 0.0
        %727 = vmatprep.subr.mxu0 0.0
        %728 = vmatpush1.msra.mxu0 0.0
        %729 = vmatprep.subr.mxu0 0.0
        %730 = vmatpush1.msra.mxu0 0.0
        %731 = vmatprep.subr.mxu0 0.0
        %732 = vmatpush1.msra.mxu0 0.0
        %733 = vmatprep.subr.mxu0 0.0
        %734 = vmatpush1.msra.mxu0 0.0
        %735 = vmatprep.subr.mxu0 0.0
        %736 = vmatpush1.msra.mxu0 0.0
        %737 = vmatprep.subr.mxu0 0.0
        %738 = vmatpush1.msra.mxu0 0.0
        %739 = vmatprep.subr.mxu0 0.0
        %740 = vmatpush1.msra.mxu0 0.0
        %741 = vmatprep.subr.mxu0 0.0
        %742 = vmatpush1.msra.mxu0 0.0
        %743 = vmatprep.subr.mxu0 0.0
        %744 = vmatpush1.msra.mxu0 0.0
        %745 = vmatprep.subr.mxu0 0.0
        %746 = vmatpush1.msra.mxu0 0.0
        %747 = vmatprep.subr.mxu0 0.0
        %748 = vmatpush1.msra.mxu0 0.0
        %749 = vmatprep.subr.mxu0 0.0
        %750 = vmatpush1.msra.mxu0 0.0
        %751 = vmatprep.subr.mxu0 0.0
        %752 = vmatpush1.msra.mxu0 0.0
        %753 = vmatprep.subr.mxu0 0.0
        %754 = vmatpush1.msra.mxu0 0.0
        %755 = vmatprep.subr.mxu0 0.0
        %756 = vmatpush1.msra.mxu0 %v456
        %757 = vmatprep.subr.mxu0 0.0
        %758 = vmatpush2.msra.mxu0 0.0
        %759 = vmatprep.subr.mxu0 0.0
        %760 = vmatpush2.msra.mxu0 0.0
        %761 = vmatprep.subr.mxu0 0.0
        %762 = vmatpush2.msra.mxu0 0.0
        %763 = vmatprep.subr.mxu0 0.0
        %764 = vmatpush2.msra.mxu0 0.0
        %765 = vmatprep.subr.mxu0 0.0
        %766 = vmatpush2.msra.mxu0 0.0
        %767 = vmatprep.subr.mxu0 0.0
        %768 = vmatpush2.msra.mxu0 0.0
        %769 = vmatprep.subr.mxu0 0.0
        %770 = vmatpush2.msra.mxu0 0.0
        %771 = vmatprep.subr.mxu0 0.0
        %772 = vmatpush2.msra.mxu0 0.0
        %773 = vmatprep.subr.mxu0 0.0
        %774 = vmatpush2.msra.mxu0 0.0
        %775 = vmatprep.subr.mxu0 0.0
        %776 = vmatpush2.msra.mxu0 0.0
        %777 = vmatprep.subr.mxu0 0.0
        %778 = vmatpush2.msra.mxu0 0.0
        %779 = vmatprep.subr.mxu0 0.0
        %780 = vmatpush2.msra.mxu0 0.0
        %781 = vmatprep.subr.mxu0 0.0
        %782 = vmatpush2.msra.mxu0 0.0
        %783 = vmatprep.subr.mxu0 0.0
        %784 = vmatpush2.msra.mxu0 0.0
        %785 = vmatprep.subr.mxu0 0.0
        %786 = vmatpush2.msra.mxu0 0.0
        %787 = vmatprep.subr.mxu0 0.0
        %788 = vmatpush2.msra.mxu0 0.0
        %789 = vmatprep.mubr.f32.mxu0 0.0
        %790 = vmatmul.mubr.f32.gmra.mxu0 %v723
        %v791 = vpop.f32.mrf.mxu0
        %v792 = vadd.f32 0.0, %v791
        %v793 = vpop.f32.mrf.mxu0
        %794 = vdwg.mxu0
        %803 = vset.pattern.permute.xlu0 0
        %804 = vperm.xlu0 %803, %v637
        %v805 = vpop.permute.xlu0 %804
        %806 = vset.pattern.permute.xlu0 0
        %807 = vperm.xlu0 %806, %v638
        %v808 = vpop.permute.xlu0 %807
        %809 = vset.pattern.permute.xlu0 0
        %810 = vperm.xlu0 %809, %v639
        %v811 = vpop.permute.xlu0 %810
        %812 = vset.pattern.permute.xlu0 0
        %813 = vperm.xlu0 %812, %v640
        %v814 = vpop.permute.xlu0 %813
        %815 = vset.pattern.permute.xlu0 0
        %816 = vperm.xlu0 %815, %v641
        %v817 = vpop.permute.xlu0 %816
        %818 = vset.pattern.permute.xlu0 0
        %819 = vperm.xlu0 %818, %v642
        %v820 = vpop.permute.xlu0 %819
        %821 = vset.pattern.permute.xlu0 0
        %822 = vperm.xlu0 %821, %v643
        %v823 = vpop.permute.xlu0 %822
        %824 = vset.pattern.permute.xlu0 0
        %825 = vperm.xlu0 %824, %v644
        %v826 = vpop.permute.xlu0 %825
        %v827 = vlaneseq
        %v828 = vshrl.u32 %v827, 7
        %v829 = vsub.s32 %v464, %v828
        %v830 = vrot.slane %v805, %v829
        %v831 = vlaneseq
        %v832 = vshrl.u32 %v831, 7
        %v833 = vsub.s32 %v464, %v832
        %v834 = vrot.slane %v808, %v833
        %v835 = vlaneseq
        %v836 = vshrl.u32 %v835, 7
        %v837 = vsub.s32 %v464, %v836
        %v838 = vrot.slane %v811, %v837
        %v839 = vlaneseq
        %v840 = vshrl.u32 %v839, 7
        %v841 = vsub.s32 %v464, %v840
        %v842 = vrot.slane %v814, %v841
        %v843 = vlaneseq
        %v844 = vshrl.u32 %v843, 7
        %v845 = vsub.s32 %v464, %v844
        %v846 = vrot.slane %v817, %v845
        %v847 = vlaneseq
        %v848 = vshrl.u32 %v847, 7
        %v849 = vsub.s32 %v464, %v848
        %v850 = vrot.slane %v820, %v849
        %v851 = vlaneseq
        %v852 = vshrl.u32 %v851, 7
        %v853 = vsub.s32 %v464, %v852
        %v854 = vrot.slane %v823, %v853
        %v855 = vlaneseq
        %v856 = vshrl.u32 %v855, 7
        %v857 = vsub.s32 %v464, %v856
        %v858 = vrot.slane %v826, %v857
        %v859 = vsel %vm709, %v834, %v830
        %v860 = vsel %vm711, %v838, %v859
        %v861 = vsel %vm713, %v842, %v860
        %v862 = vsel %vm715, %v846, %v861
        %v863 = vsel %vm717, %v850, %v862
        %v864 = vsel %vm719, %v854, %v863
        %v865 = vsel %vm721, %v858, %v864
        %v866 = vsel %vm538, %v865, 0
        %868 = vmatprep.subr.mxu0 0.0
        %869 = vmatpush1.msra.mxu0 0.0
        %870 = vmatprep.subr.mxu0 0.0
        %871 = vmatpush1.msra.mxu0 0.0
        %872 = vmatprep.subr.mxu0 0.0
        %873 = vmatpush1.msra.mxu0 0.0
        %874 = vmatprep.subr.mxu0 0.0
        %875 = vmatpush1.msra.mxu0 0.0
        %876 = vmatprep.subr.mxu0 0.0
        %877 = vmatpush1.msra.mxu0 0.0
        %878 = vmatprep.subr.mxu0 0.0
        %879 = vmatpush1.msra.mxu0 0.0
        %880 = vmatprep.subr.mxu0 0.0
        %881 = vmatpush1.msra.mxu0 0.0
        %882 = vmatprep.subr.mxu0 0.0
        %883 = vmatpush1.msra.mxu0 0.0
        %884 = vmatprep.subr.mxu0 0.0
        %885 = vmatpush1.msra.mxu0 0.0
        %886 = vmatprep.subr.mxu0 0.0
        %887 = vmatpush1.msra.mxu0 0.0
        %888 = vmatprep.subr.mxu0 0.0
        %889 = vmatpush1.msra.mxu0 0.0
        %890 = vmatprep.subr.mxu0 0.0
        %891 = vmatpush1.msra.mxu0 0.0
        %892 = vmatprep.subr.mxu0 0.0
        %893 = vmatpush1.msra.mxu0 0.0
        %894 = vmatprep.subr.mxu0 0.0
        %895 = vmatpush1.msra.mxu0 0.0
        %896 = vmatprep.subr.mxu0 0.0
        %897 = vmatpush1.msra.mxu0 0.0
        %898 = vmatprep.subr.mxu0 0.0
        %899 = vmatpush1.msra.mxu0 %v457
        %900 = vmatprep.subr.mxu0 0.0
        %901 = vmatpush2.msra.mxu0 0.0
        %902 = vmatprep.subr.mxu0 0.0
        %903 = vmatpush2.msra.mxu0 0.0
        %904 = vmatprep.subr.mxu0 0.0
        %905 = vmatpush2.msra.mxu0 0.0
        %906 = vmatprep.subr.mxu0 0.0
        %907 = vmatpush2.msra.mxu0 0.0
        %908 = vmatprep.subr.mxu0 0.0
        %909 = vmatpush2.msra.mxu0 0.0
        %910 = vmatprep.subr.mxu0 0.0
        %911 = vmatpush2.msra.mxu0 0.0
        %912 = vmatprep.subr.mxu0 0.0
        %913 = vmatpush2.msra.mxu0 0.0
        %914 = vmatprep.subr.mxu0 0.0
        %915 = vmatpush2.msra.mxu0 0.0
        %916 = vmatprep.subr.mxu0 0.0
        %917 = vmatpush2.msra.mxu0 0.0
        %918 = vmatprep.subr.mxu0 0.0
        %919 = vmatpush2.msra.mxu0 0.0
        %920 = vmatprep.subr.mxu0 0.0
        %921 = vmatpush2.msra.mxu0 0.0
        %922 = vmatprep.subr.mxu0 0.0
        %923 = vmatpush2.msra.mxu0 0.0
        %924 = vmatprep.subr.mxu0 0.0
        %925 = vmatpush2.msra.mxu0 0.0
        %926 = vmatprep.subr.mxu0 0.0
        %927 = vmatpush2.msra.mxu0 0.0
        %928 = vmatprep.subr.mxu0 0.0
        %929 = vmatpush2.msra.mxu0 0.0
        %930 = vmatprep.subr.mxu0 0.0
        %931 = vmatpush2.msra.mxu0 0.0
        %932 = vmatprep.mubr.f32.mxu0 0.0
        %933 = vmatmul.mubr.f32.gmra.mxu0 %v866
        %v934 = vpop.f32.mrf.mxu0
        %v935 = vadd.f32 0.0, %v934
        %v936 = vpop.f32.mrf.mxu0
        %937 = vdwg.mxu0
        %939 = vbcast.lane.b32.xlu0 %v516, 256
        %v940 = vpop.permute.xlu0 %939
        %942 = vbcast.lane.b32.xlu0 %v520, 256
        %v943 = vpop.permute.xlu0 %942
        %v946 = vmul.f32 %v629, %v940
        %v947 = vmul.f32 %v630, %v940
        %v948 = vmul.f32 %v631, %v940
        %v949 = vmul.f32 %v632, %v940
        %v950 = vmul.f32 %v633, %v940
        %v951 = vmul.f32 %v634, %v940
        %v952 = vmul.f32 %v635, %v940
        %v953 = vmul.f32 %v636, %v940
        %v954 = vmul.f32 %v637, %v943
        %v955 = vmul.f32 %v638, %v943
        %v956 = vmul.f32 %v639, %v943
        %v957 = vmul.f32 %v640, %v943
        %v958 = vmul.f32 %v641, %v943
        %v959 = vmul.f32 %v642, %v943
        %v960 = vmul.f32 %v643, %v943
        %v961 = vmul.f32 %v644, %v943
        %978 = vset.pattern.permute.xlu0 0
        %979 = vperm.xlu0 %978, %v946
        %v980 = vpop.permute.xlu0 %979
        %981 = vset.pattern.permute.xlu0 0
        %982 = vperm.xlu0 %981, %v947
        %v983 = vpop.permute.xlu0 %982
        %984 = vset.pattern.permute.xlu0 0
        %985 = vperm.xlu0 %984, %v948
        %v986 = vpop.permute.xlu0 %985
        %987 = vset.pattern.permute.xlu0 0
        %988 = vperm.xlu0 %987, %v949
        %v989 = vpop.permute.xlu0 %988
        %990 = vset.pattern.permute.xlu0 0
        %991 = vperm.xlu0 %990, %v950
        %v992 = vpop.permute.xlu0 %991
        %993 = vset.pattern.permute.xlu0 0
        %994 = vperm.xlu0 %993, %v951
        %v995 = vpop.permute.xlu0 %994
        %996 = vset.pattern.permute.xlu0 0
        %997 = vperm.xlu0 %996, %v952
        %v998 = vpop.permute.xlu0 %997
        %999 = vset.pattern.permute.xlu0 0
        %1000 = vperm.xlu0 %999, %v953
        %v1001 = vpop.permute.xlu0 %1000
        %1002 = vset.pattern.permute.xlu0 0
        %1003 = vperm.xlu0 %1002, %v954
        %v1004 = vpop.permute.xlu0 %1003
        %1005 = vset.pattern.permute.xlu0 0
        %1006 = vperm.xlu0 %1005, %v955
        %v1007 = vpop.permute.xlu0 %1006
        %1008 = vset.pattern.permute.xlu0 0
        %1009 = vperm.xlu0 %1008, %v956
        %v1010 = vpop.permute.xlu0 %1009
        %1011 = vset.pattern.permute.xlu0 0
        %1012 = vperm.xlu0 %1011, %v957
        %v1013 = vpop.permute.xlu0 %1012
        %1014 = vset.pattern.permute.xlu0 0
        %1015 = vperm.xlu0 %1014, %v958
        %v1016 = vpop.permute.xlu0 %1015
        %1017 = vset.pattern.permute.xlu0 0
        %1018 = vperm.xlu0 %1017, %v959
        %v1019 = vpop.permute.xlu0 %1018
        %1020 = vset.pattern.permute.xlu0 0
        %1021 = vperm.xlu0 %1020, %v960
        %v1022 = vpop.permute.xlu0 %1021
        %1023 = vset.pattern.permute.xlu0 0
        %1024 = vperm.xlu0 %1023, %v961
        %v1025 = vpop.permute.xlu0 %1024
        %v1026 = vlaneseq
        %v1027 = vshrl.u32 %v1026, 7
        %v1028 = vsub.s32 %v464, %v1027
        %v1029 = vrot.slane %v980, %v1028
        %v1030 = vlaneseq
        %v1031 = vshrl.u32 %v1030, 7
        %v1032 = vsub.s32 %v464, %v1031
        %v1033 = vrot.slane %v983, %v1032
        %v1034 = vlaneseq
        %v1035 = vshrl.u32 %v1034, 7
        %v1036 = vsub.s32 %v464, %v1035
        %v1037 = vrot.slane %v986, %v1036
        %v1038 = vlaneseq
        %v1039 = vshrl.u32 %v1038, 7
        %v1040 = vsub.s32 %v464, %v1039
        %v1041 = vrot.slane %v989, %v1040
        %v1042 = vlaneseq
        %v1043 = vshrl.u32 %v1042, 7
        %v1044 = vsub.s32 %v464, %v1043
        %v1045 = vrot.slane %v992, %v1044
        %v1046 = vlaneseq
        %v1047 = vshrl.u32 %v1046, 7
        %v1048 = vsub.s32 %v464, %v1047
        %v1049 = vrot.slane %v995, %v1048
        %v1050 = vlaneseq
        %v1051 = vshrl.u32 %v1050, 7
        %v1052 = vsub.s32 %v464, %v1051
        %v1053 = vrot.slane %v998, %v1052
        %v1054 = vlaneseq
        %v1055 = vshrl.u32 %v1054, 7
        %v1056 = vsub.s32 %v464, %v1055
        %v1057 = vrot.slane %v1001, %v1056
        %v1058 = vlaneseq
        %v1059 = vshrl.u32 %v1058, 7
        %v1060 = vsub.s32 %v464, %v1059
        %v1061 = vrot.slane %v1004, %v1060
        %v1062 = vlaneseq
        %v1063 = vshrl.u32 %v1062, 7
        %v1064 = vsub.s32 %v464, %v1063
        %v1065 = vrot.slane %v1007, %v1064
        %v1066 = vlaneseq
        %v1067 = vshrl.u32 %v1066, 7
        %v1068 = vsub.s32 %v464, %v1067
        %v1069 = vrot.slane %v1010, %v1068
        %v1070 = vlaneseq
        %v1071 = vshrl.u32 %v1070, 7
        %v1072 = vsub.s32 %v464, %v1071
        %v1073 = vrot.slane %v1013, %v1072
        %v1074 = vlaneseq
        %v1075 = vshrl.u32 %v1074, 7
        %v1076 = vsub.s32 %v464, %v1075
        %v1077 = vrot.slane %v1016, %v1076
        %v1078 = vlaneseq
        %v1079 = vshrl.u32 %v1078, 7
        %v1080 = vsub.s32 %v464, %v1079
        %v1081 = vrot.slane %v1019, %v1080
        %v1082 = vlaneseq
        %v1083 = vshrl.u32 %v1082, 7
        %v1084 = vsub.s32 %v464, %v1083
        %v1085 = vrot.slane %v1022, %v1084
        %v1086 = vlaneseq
        %v1087 = vshrl.u32 %v1086, 7
        %v1088 = vsub.s32 %v464, %v1087
        %v1089 = vrot.slane %v1025, %v1088
        %v1090 = vsel %vm709, %v1033, %v1029
        %v1091 = vsel %vm711, %v1037, %v1090
        %v1092 = vsel %vm713, %v1041, %v1091
        %v1093 = vsel %vm715, %v1045, %v1092
        %v1094 = vsel %vm717, %v1049, %v1093
        %v1095 = vsel %vm719, %v1053, %v1094
        %v1096 = vsel %vm721, %v1057, %v1095
        %v1097 = vsel %vm709, %v1065, %v1061
        %v1098 = vsel %vm711, %v1069, %v1097
        %v1099 = vsel %vm713, %v1073, %v1098
        %v1100 = vsel %vm715, %v1077, %v1099
        %v1101 = vsel %vm717, %v1081, %v1100
        %v1102 = vsel %vm719, %v1085, %v1101
        %v1103 = vsel %vm721, %v1089, %v1102
        %v1106 = vsel %vm538, %v1096, 0.0
        %1107 = vadd.xlane.f32.xlu0 %v1106
        %v1108 = vpop.xlane.xlu0 %1107
        %v1109 = vsel %vm538, %v1103, 0.0
        %1110 = vadd.xlane.f32.xlu0 %v1109
        %v1111 = vpop.xlane.xlu0 %1110
        %v1112 = vld [vmem:[%s360] sm:$0x1]
        %v1113 = vld [vmem:[%s360 + $0x1] sm:$0x1]
        %v1114 = vld [vmem:[%s360 + $0x2] sm:$0x1]
        %v1117 = vlaneseq
        %v1118 = vshrl.u32 %v1117, 7
        %v1119 = vsub.s32 %v464, %v1118
        %v1120 = vrot.slane %v1108, %v1119
        %v1121 = vlaneseq
        %v1122 = vshrl.u32 %v1121, 7
        %v1123 = vsub.s32 %v464, %v1122
        %v1124 = vrot.slane %v1111, %v1123
        %v1125 = vsel %vm709, %v1124, %v1120
        %v1127 = vsel %vm459, %v1125, -inf
        %1128 = vmax.xlane.f32.xlu0 %v1127
        %v1129 = vpop.xlane.xlu0 %1128
        %v1131 = vlaneseq
        %v1132 = vshrl.u32 %v1131, 7
        %v1133 = vsub.s32 0, %v1132
        %v1134 = vrot.slane %v1129, %v1133
        %v1135 = vlaneseq
        %v1136 = vshrl.u32 %v1135, 7
        %v1137 = vsub.s32 1, %v1136
        %v1138 = vrot.slane %v1129, %v1137
        %v1141 = vsub.f32 %v1108, %v1134
        %v1142 = vsub.f32 %v1111, %v1138
        %v1143 = vmul.f32 %v1141, 1.442695
        %v1144 = vpow.pop %v1143
        %v1145 = vmul.f32 %v1142, 1.442695
        %v1146 = vpow.pop %v1145
        %1149 = vset.pattern.permute.xlu0 0
        %1150 = vperm.xlu0 %1149, %v1144
        %v1151 = vpop.permute.xlu0 %1150
        %1152 = vset.pattern.permute.xlu0 0
        %1153 = vperm.xlu0 %1152, %v1146
        %v1154 = vpop.permute.xlu0 %1153
        %v1155 = vlaneseq
        %v1156 = vshrl.u32 %v1155, 7
        %v1157 = vsub.s32 %v464, %v1156
        %v1158 = vrot.slane %v1151, %v1157
        %v1159 = vlaneseq
        %v1160 = vshrl.u32 %v1159, 7
        %v1161 = vsub.s32 %v464, %v1160
        %v1162 = vrot.slane %v1154, %v1161
        %v1163 = vsel %vm709, %v1162, %v1158
        %v1165 = vsel %vm459, %v1163, 0.0
        %1166 = vadd.xlane.f32.xlu0 %v1165
        %v1167 = vpop.xlane.xlu0 %1166
        %v1168 = vrcp.pop %v1167
        %v1170 = vlaneseq
        %v1171 = vshrl.u32 %v1170, 7
        %v1172 = vsub.s32 0, %v1171
        %v1173 = vrot.slane %v1168, %v1172
        %v1174 = vlaneseq
        %v1175 = vshrl.u32 %v1174, 7
        %v1176 = vsub.s32 1, %v1175
        %v1177 = vrot.slane %v1168, %v1176
        %v1180 = vmul.f32 %v1144, %v1173
        %v1181 = vmul.f32 %v1146, %v1177
        %1183 = vset.pattern.permute.xlu0 0
        %1184 = vperm.xlu0 %1183, %v1114
        %v1185 = vpop.permute.xlu0 %1184
        %1189 = vset.pattern.permute.xlu0 0
        %1190 = vperm.xlu0 %1189, %v1180
        %v1191 = vpop.permute.xlu0 %1190
        %1192 = vset.pattern.permute.xlu0 0
        %1193 = vperm.xlu0 %1192, %v1181
        %v1194 = vpop.permute.xlu0 %1193
        %v1195 = vlaneseq
        %v1196 = vshrl.u32 %v1195, 7
        %v1197 = vsub.s32 %v464, %v1196
        %v1198 = vrot.slane %v1191, %v1197
        %v1199 = vlaneseq
        %v1200 = vshrl.u32 %v1199, 7
        %v1201 = vsub.s32 %v464, %v1200
        %v1202 = vrot.slane %v1194, %v1201
        %v1205 = vmul.f32 %v1185, %v1198
        %v1206 = vmul.f32 %v1185, %v1202
        %v1209 = vlaneseq
        %v1210 = vshrl.u32 %v1209, 7
        %v1211 = vsub.s32 0, %v1210
        %v1212 = vrot.slane %v1205, %v1211
        %v1213 = vlaneseq
        %v1214 = vshrl.u32 %v1213, 7
        %v1215 = vsub.s32 0, %v1214
        %v1216 = vrot.slane %v1206, %v1215
        %v1217 = vmul.f32 %v1191, %v1212
        %v1218 = vmul.f32 %v1194, %v1216
        %1219 = vset.pattern.permute.xlu0 1
        %1220 = vperm.xlu0 %1219, %v1114
        %v1221 = vpop.permute.xlu0 %1220
        %v1223 = vmul.f32 %v1221, %v1198
        %v1224 = vmul.f32 %v1221, %v1202
        %v1225 = vlaneseq
        %v1226 = vshrl.u32 %v1225, 7
        %v1227 = vsub.s32 0, %v1226
        %v1228 = vrot.slane %v1223, %v1227
        %v1229 = vlaneseq
        %v1230 = vshrl.u32 %v1229, 7
        %v1231 = vsub.s32 0, %v1230
        %v1232 = vrot.slane %v1224, %v1231
        %v1233 = vadd.f32 %v1217, %v1228
        %v1234 = vadd.f32 %v1218, %v1232
        %v1235 = vsel %vm538, %v1233, -inf
        %1236 = vmax.xlane.f32.xlu0 %v1235
        %v1237 = vpop.xlane.xlu0 %1236
        %v1238 = vsel %vm538, %v1234, -inf
        %1239 = vmax.xlane.f32.xlu0 %v1238
        %v1240 = vpop.xlane.xlu0 %1239
        %v1241 = vsub.f32 %v1233, %v1237
        %v1242 = vsub.f32 %v1234, %v1240
        %v1243 = vmul.f32 %v1241, 1.442695
        %v1244 = vpow.pop %v1243
        %v1245 = vmul.f32 %v1242, 1.442695
        %v1246 = vpow.pop %v1245
        %v1247 = vsel %vm538, %v1244, 0.0
        %1248 = vadd.xlane.f32.xlu0 %v1247
        %v1249 = vpop.xlane.xlu0 %1248
        %v1250 = vsel %vm538, %v1246, 0.0
        %1251 = vadd.xlane.f32.xlu0 %v1250
        %v1252 = vpop.xlane.xlu0 %1251
        %v1253 = vrcp.pop %v1249
        %v1254 = vrcp.pop %v1252
        %v1255 = vmul.f32 %v1244, %v1253
        %v1256 = vmul.f32 %v1246, %v1254
        %v1257 = vld [vmem:[%s408] sm:$0xff]
        %1258 = vrot.lane.b32.xlu0 %v1114, 126
        %v1259 = vpop.permute.xlu0 %1258
        %s1260 = vtos %v1259
        %v1261 = vstv %s1260
        %v1263 = vmul.f32 %v1261, %v1255
        %v1264 = vmul.f32 %v1261, %v1256
        %v1265 = vadd.f32 %v1257, %v1263
        %v1266 = vadd.f32 %v1257, %v1264
        %v1267 = vpack.c.bf16 %v1265, %v1265
        %v1268 = vpack.c.bf16 %v1266, %v1266
        %v1269 = vpack.c.bf16 %v792, %v792
        %v1270 = vpack.c.bf16 %v935, %v935
        %v1272 = vsel %vm538, %v1267, 0
        %vm1274 = vcmask 1043456
        %v1276 = vsel %vm1274, %v1269, 0
        %1278 = vmatprep.subr.bf16.mxu0 0
        %1279 = vmatpush1.bf16.msra.mxu0 0
        %1280 = vmatprep.subr.bf16.mxu0 0
        %1281 = vmatpush1.bf16.msra.mxu0 0
        %1282 = vmatprep.subr.bf16.mxu0 0
        %1283 = vmatpush1.bf16.msra.mxu0 0
        %1284 = vmatprep.subr.bf16.mxu0 0
        %1285 = vmatpush1.bf16.msra.mxu0 0
        %1286 = vmatprep.subr.bf16.mxu0 0
        %1287 = vmatpush1.bf16.msra.mxu0 0
        %1288 = vmatprep.subr.bf16.mxu0 0
        %1289 = vmatpush1.bf16.msra.mxu0 0
        %1290 = vmatprep.subr.bf16.mxu0 0
        %1291 = vmatpush1.bf16.msra.mxu0 0
        %1292 = vmatprep.subr.bf16.mxu0 0
        %1293 = vmatpush1.bf16.msra.mxu0 %v1276
        %1294 = vmatprep.subr.bf16.mxu0 0
        %1295 = vmatpush2.bf16.msra.mxu0 0
        %1296 = vmatprep.subr.bf16.mxu0 0
        %1297 = vmatpush2.bf16.msra.mxu0 0
        %1298 = vmatprep.subr.bf16.mxu0 0
        %1299 = vmatpush2.bf16.msra.mxu0 0
        %1300 = vmatprep.subr.bf16.mxu0 0
        %1301 = vmatpush2.bf16.msra.mxu0 0
        %1302 = vmatprep.subr.bf16.mxu0 0
        %1303 = vmatpush2.bf16.msra.mxu0 0
        %1304 = vmatprep.subr.bf16.mxu0 0
        %1305 = vmatpush2.bf16.msra.mxu0 0
        %1306 = vmatprep.subr.bf16.mxu0 0
        %1307 = vmatpush2.bf16.msra.mxu0 0
        %1308 = vmatprep.subr.bf16.mxu0 0
        %1309 = vmatpush2.bf16.msra.mxu0 0
        %1310 = vmatprep.mubr.bf16.mxu0 0
        %1311 = vmatmul.mubr.bf16.gmra.mxu0 %v1272
        %v1312 = vpop.f32.mrf.mxu0
        %v1313 = vadd.f32 0.0, %v1312
        %v1314 = vpop.f32.mrf.mxu0
        %v1315 = vpop.f32.mrf.mxu0
        %v1316 = vpop.f32.mrf.mxu0
        %1317 = vdwg.mxu0
        %v1319 = vsel %vm538, %v1268, 0
        %v1322 = vsel %vm1274, %v1270, 0
        %1324 = vmatprep.subr.bf16.mxu0 0
        %1325 = vmatpush1.bf16.msra.mxu0 0
        %1326 = vmatprep.subr.bf16.mxu0 0
        %1327 = vmatpush1.bf16.msra.mxu0 0
        %1328 = vmatprep.subr.bf16.mxu0 0
        %1329 = vmatpush1.bf16.msra.mxu0 0
        %1330 = vmatprep.subr.bf16.mxu0 0
        %1331 = vmatpush1.bf16.msra.mxu0 0
        %1332 = vmatprep.subr.bf16.mxu0 0
        %1333 = vmatpush1.bf16.msra.mxu0 0
        %1334 = vmatprep.subr.bf16.mxu0 0
        %1335 = vmatpush1.bf16.msra.mxu0 0
        %1336 = vmatprep.subr.bf16.mxu0 0
        %1337 = vmatpush1.bf16.msra.mxu0 0
        %1338 = vmatprep.subr.bf16.mxu0 0
        %1339 = vmatpush1.bf16.msra.mxu0 %v1322
        %1340 = vmatprep.subr.bf16.mxu0 0
        %1341 = vmatpush2.bf16.msra.mxu0 0
        %1342 = vmatprep.subr.bf16.mxu0 0
        %1343 = vmatpush2.bf16.msra.mxu0 0
        %1344 = vmatprep.subr.bf16.mxu0 0
        %1345 = vmatpush2.bf16.msra.mxu0 0
        %1346 = vmatprep.subr.bf16.mxu0 0
        %1347 = vmatpush2.bf16.msra.mxu0 0
        %1348 = vmatprep.subr.bf16.mxu0 0
        %1349 = vmatpush2.bf16.msra.mxu0 0
        %1350 = vmatprep.subr.bf16.mxu0 0
        %1351 = vmatpush2.bf16.msra.mxu0 0
        %1352 = vmatprep.subr.bf16.mxu0 0
        %1353 = vmatpush2.bf16.msra.mxu0 0
        %1354 = vmatprep.subr.bf16.mxu0 0
        %1355 = vmatpush2.bf16.msra.mxu0 0
        %1356 = vmatprep.mubr.bf16.mxu0 0
        %1357 = vmatmul.mubr.bf16.gmra.mxu0 %v1319
        %v1358 = vpop.f32.mrf.mxu0
        %v1359 = vadd.f32 0.0, %v1358
        %v1360 = vpop.f32.mrf.mxu0
        %v1361 = vpop.f32.mrf.mxu0
        %v1362 = vpop.f32.mrf.mxu0
        %1363 = vdwg.mxu0
        %v1364 = vpack.c.bf16 %v1359, %v1313
        %v1365 = vld [vmem:[%s413] sm:$0xf]
        %v1366 = vld [vmem:[%s413 + $0x4] sm:$0xf]
        %v1367 = vld [vmem:[%s413 + $0x8] sm:$0xf]
        %v1368 = vld [vmem:[%s413 + $0xc] sm:$0xf]
        %v1369 = vlaneseq
        %v1370 = vshrl.u32 %v1369, 7
        %v1371 = vsub.s32 0, %v1370
        %v1372 = vrot.slane %v1112, %v1371
        %v1377 = vunpack.c.l.b16 %v1365
        %v1378 = vunpack.c.l.b16 %v1366
        %v1379 = vunpack.c.l.b16 %v1367
        %v1380 = vunpack.c.l.b16 %v1368
        %v1381 = vpack.c.b16 %v1378, %v1377
        %v1382 = vpack.c.b16 %v1380, %v1379
        %vm1385 = vcmask 261120
        %v1387 = vsel %vm1385, %v1364, 0
        %1389 = vmatprep.subr.bf16.mxu0 0
        %1390 = vmatpush1.bf16.msra.mxu0 0
        %1391 = vmatprep.subr.bf16.mxu0 0
        %1392 = vmatpush1.bf16.msra.mxu0 0
        %1393 = vmatprep.subr.bf16.mxu0 0
        %1394 = vmatpush1.bf16.msra.mxu0 0
        %1395 = vmatprep.subr.bf16.mxu0 0
        %1396 = vmatpush1.bf16.msra.mxu0 0
        %1397 = vmatprep.subr.bf16.mxu0 0
        %1398 = vmatpush1.bf16.msra.mxu0 0
        %1399 = vmatprep.subr.bf16.mxu0 0
        %1400 = vmatpush1.bf16.msra.mxu0 0
        %1401 = vmatprep.subr.bf16.mxu0 0
        %1402 = vmatpush1.bf16.msra.mxu0 %v1382
        %1403 = vmatprep.subr.bf16.mxu0 0
        %1404 = vmatpush1.bf16.msra.mxu0 %v1381
        %1405 = vmatprep.subr.bf16.mxu0 0
        %1406 = vmatpush2.bf16.msra.mxu0 0
        %1407 = vmatprep.subr.bf16.mxu0 0
        %1408 = vmatpush2.bf16.msra.mxu0 0
        %1409 = vmatprep.subr.bf16.mxu0 0
        %1410 = vmatpush2.bf16.msra.mxu0 0
        %1411 = vmatprep.subr.bf16.mxu0 0
        %1412 = vmatpush2.bf16.msra.mxu0 0
        %1413 = vmatprep.subr.bf16.mxu0 0
        %1414 = vmatpush2.bf16.msra.mxu0 0
        %1415 = vmatprep.subr.bf16.mxu0 0
        %1416 = vmatpush2.bf16.msra.mxu0 0
        %1417 = vmatprep.subr.bf16.mxu0 0
        %1418 = vmatpush2.bf16.msra.mxu0 0
        %1419 = vmatprep.subr.bf16.mxu0 0
        %1420 = vmatpush2.bf16.msra.mxu0 0
        %1421 = vmatprep.mubr.bf16.mxu0 0
        %1422 = vmatmul.mubr.bf16.gmra.mxu0 %v1387
        %v1423 = vpop.f32.mrf.mxu0
        %v1424 = vadd.f32 %v1372, %v1423
        %v1425 = vpop.f32.mrf.mxu0
        %v1426 = vpop.f32.mrf.mxu0
        %v1427 = vadd.f32 %v1372, %v1426
        %v1428 = vpop.f32.mrf.mxu0
        %1429 = vdwg.mxu0
        %v1430 = vmax.f32 %v1424, 0.0
        %v1431 = vmax.f32 %v1427, 0.0
        %v1432 = vpack.c.bf16 %v1431, %v1430
        %v1433 = vld [vmem:[%s351] sm:$0xf]
        %v1434 = vld [vmem:[%s351 + $0x4] sm:$0xf]
        %v1435 = vld [vmem:[%s351 + $0x8] sm:$0xf]
        %v1436 = vld [vmem:[%s351 + $0xc] sm:$0xf]
        %v1437 = vlaneseq
        %v1438 = vshrl.u32 %v1437, 7
        %v1439 = vsub.s32 0, %v1438
        %v1440 = vrot.slane %v1113, %v1439
        %v1445 = vunpack.c.l.b16 %v1433
        %v1446 = vunpack.c.l.b16 %v1434
        %v1447 = vunpack.c.l.b16 %v1435
        %v1448 = vunpack.c.l.b16 %v1436
        %v1449 = vpack.c.b16 %v1446, %v1445
        %v1450 = vpack.c.b16 %v1448, %v1447
        %v1454 = vsel %vm1385, %v1432, 0
        %1456 = vmatprep.subr.bf16.mxu0 0
        %1457 = vmatpush1.bf16.msra.mxu0 0
        %1458 = vmatprep.subr.bf16.mxu0 0
        %1459 = vmatpush1.bf16.msra.mxu0 0
        %1460 = vmatprep.subr.bf16.mxu0 0
        %1461 = vmatpush1.bf16.msra.mxu0 0
        %1462 = vmatprep.subr.bf16.mxu0 0
        %1463 = vmatpush1.bf16.msra.mxu0 0
        %1464 = vmatprep.subr.bf16.mxu0 0
        %1465 = vmatpush1.bf16.msra.mxu0 0
        %1466 = vmatprep.subr.bf16.mxu0 0
        %1467 = vmatpush1.bf16.msra.mxu0 0
        %1468 = vmatprep.subr.bf16.mxu0 0
        %1469 = vmatpush1.bf16.msra.mxu0 %v1450
        %1470 = vmatprep.subr.bf16.mxu0 0
        %1471 = vmatpush1.bf16.msra.mxu0 %v1449
        %1472 = vmatprep.subr.bf16.mxu0 0
        %1473 = vmatpush2.bf16.msra.mxu0 0
        %1474 = vmatprep.subr.bf16.mxu0 0
        %1475 = vmatpush2.bf16.msra.mxu0 0
        %1476 = vmatprep.subr.bf16.mxu0 0
        %1477 = vmatpush2.bf16.msra.mxu0 0
        %1478 = vmatprep.subr.bf16.mxu0 0
        %1479 = vmatpush2.bf16.msra.mxu0 0
        %1480 = vmatprep.subr.bf16.mxu0 0
        %1481 = vmatpush2.bf16.msra.mxu0 0
        %1482 = vmatprep.subr.bf16.mxu0 0
        %1483 = vmatpush2.bf16.msra.mxu0 0
        %1484 = vmatprep.subr.bf16.mxu0 0
        %1485 = vmatpush2.bf16.msra.mxu0 0
        %1486 = vmatprep.subr.bf16.mxu0 0
        %1487 = vmatpush2.bf16.msra.mxu0 0
        %1488 = vmatprep.mubr.bf16.mxu0 0
        %1489 = vmatmul.mubr.bf16.gmra.mxu0 %v1454
        %v1490 = vpop.f32.mrf.mxu0
        %v1491 = vadd.f32 %v1440, %v1490
        %v1492 = vpop.f32.mrf.mxu0
        %v1493 = vpop.f32.mrf.mxu0
        %v1494 = vadd.f32 %v1440, %v1493
        %v1495 = vpop.f32.mrf.mxu0
        %1496 = vdwg.mxu0
        %v1497 = vld [vmem:[%s417] sm:$0xff]
        %1499 = vset.pattern.permute.xlu0 0
        %1500 = vperm.xlu0 %1499, %v1497
        %v1501 = vpop.permute.xlu0 %1500
        %v1503 = vmul.f32 %v1501, %v792
        %v1504 = vmul.f32 %v1501, %v935
        %1505 = vset.pattern.permute.xlu0 1
        %1506 = vperm.xlu0 %1505, %v1497
        %v1507 = vpop.permute.xlu0 %1506
        %v1509 = vmul.f32 %v1507, %v1313
        %v1510 = vmul.f32 %v1507, %v1359
        %v1511 = vadd.f32 %v1503, %v1509
        %v1512 = vadd.f32 %v1504, %v1510
        %1513 = vset.pattern.permute.xlu0 2
        %1514 = vperm.xlu0 %1513, %v1497
        %v1515 = vpop.permute.xlu0 %1514
        %v1517 = vmul.f32 %v1515, %v1491
        %v1518 = vmul.f32 %v1515, %v1494
        %v1519 = vadd.f32 %v1511, %v1517
        %v1520 = vadd.f32 %v1512, %v1518
        %v1521 = vmul.f32 %v1519, %v1519
        %v1522 = vmul.f32 %v1520, %v1520
        %v1523 = vsel %vm1385, %v1521, 0.0
        %1524 = vadd.xlane.f32.xlu0 %v1523
        %v1525 = vpop.xlane.xlu0 %1524
        %v1526 = vsel %vm1385, %v1522, 0.0
        %1527 = vadd.xlane.f32.xlu0 %v1526
        %v1528 = vpop.xlane.xlu0 %1527
        %vm1529 = vcmp.lt.f32.partialorder %v1108, %v1525
        %vm1530 = vcmp.lt.f32.partialorder %v1111, %v1528
        %v1531 = vsel %vm1529, 1, 0
        %v1532 = vsel %vm1530, 1, 0
        %vm1533 = vcmp.eq.s32.totalorder %v1531, 1
        %vm1534 = vcmp.eq.s32.totalorder %v1532, 1
        %v1535 = vsel %vm1533, %v792, %v1519
        %v1536 = vsel %vm1534, %v935, %v1520
        %1537 = vst.msk [vmem:[#allocation9] sm:$0xff] %vm1385, %v1535
        %1538 = vst.msk [vmem:[#allocation9 + $0x8] sm:$0xff] %vm1385, %v1536
        %v1539 = vsel %vm1529, %v1108, %v1525
        %v1540 = vsel %vm1530, %v1111, %v1528
        %v1543 = vlaneseq
        %v1544 = vshrl.u32 %v1543, 7
        %v1545 = vsub.s32 %v464, %v1544
        %v1546 = vrot.slane %v1539, %v1545
        %v1547 = vlaneseq
        %v1548 = vshrl.u32 %v1547, 7
        %v1549 = vsub.s32 %v464, %v1548
        %v1550 = vrot.slane %v1540, %v1549
        %v1551 = vsel %vm709, %v1550, %v1546
        %1553 = vst.msk [vmem:[#allocation2] sm:$0x3] %vm459, %v1551
        // Predicated region
        $region61: #{_b2opt_call.1} parent=43 // pred_check
          %p1554 = pneg %p211
        $region62: #{_b2opt_call.1} parent=43 // pred_check_branch
          %1556 = sbr.rel (%p1554) target = $region64
        $region63: #{_b2opt_call.1} parent=43 // pred_region
          %s1557 = smul.u32 2, %s29
          %s1559 = ssub.s32 256, 256
          %1560 = vsyncadd [#allocation5], %s1559
          %s1561 = smul.addr %s1557, 128
          %s1562 = scalar_lea.hbm %s6, %s1561
          %s1563 = sshll.u32 [#allocation9], 4
          %s1564 = int_to_ptr.vmem [resolvable:$true] %s1563
          %1569 = dma.vmem_to_hbm [thread:$0]  %s1564, 256, %s1562, [#allocation5], 128, 128, 8
        $region64: #{_b2opt_call.1} parent=43 // pred_fallthru
          _
        // Predicated region
        $region65: #{_b2opt_call.1} parent=43 // pred_check
          %p1570 = pneg %p237
        $region66: #{_b2opt_call.1} parent=43 // pred_check_branch
          %1572 = sbr.rel (%p1570) target = $region68
        $region67: #{_b2opt_call.1} parent=43 // pred_region
          %s1574 = ssub.s32 32, 32
          %1575 = vsyncadd [#allocation11], %s1574
          %s1576 = smul.addr %s29, 32
          %s1577 = scalar_lea.hbm %s7, %s1576
          %s1579 = sshll.u32 [#allocation10], 4
          %s1580 = int_to_ptr.vmem [resolvable:$true] %s1579
          %1582 = dma.vmem_to_hbm [thread:$0]  %s1580, 32, %s1577, [#allocation11]
        $region68: #{_b2opt_call.1} parent=43 // pred_fallthru
          _
        // Predicated region
        $region69: #{_b2opt_call.1} parent=43 // pred_check
          %p1583 = pneg %p211
        $region70: #{_b2opt_call.1} parent=43 // pred_check_branch
          %1585 = sbr.rel (%p1583) target = $region72
        $region71: #{_b2opt_call.1} parent=43 // pred_region
          %1586 = dma.done [#allocation5], 256
        $region72: #{_b2opt_call.1} parent=43 // pred_fallthru
          _
        // Predicated region
        $region73: #{_b2opt_call.1} parent=43 // pred_check
          %p1587 = pneg %p237
        $region74: #{_b2opt_call.1} parent=43 // pred_check_branch
          %1589 = sbr.rel (%p1587) target = $region76
        $region75: #{_b2opt_call.1} parent=43 // pred_region
          %1590 = dma.done [#allocation11], 32
        $region76: #{_b2opt_call.1} parent=43 // pred_fallthru
          _
      $region44: #{_b2opt_call.1} parent=5 // pred_fallthru
        _
      %p1591 = scmp.le.s32.totalorder 2, %s20
      // Predicated region
      $region77: #{_b2opt_call.1} parent=5 // pred_check
        %p1592 = pneg %p1591
      $region78: #{_b2opt_call.1} parent=5 // pred_check_branch
        %1594 = sbr.rel (%p1592) target = $region80
      $region79: #{_b2opt_call.1} parent=5 // pred_region
        %s1595 = ssub.s32 %s20, 2
      $region80: #{_b2opt_call.1} parent=5 // pred_fallthru
        _
    $region6: #{_b2opt_call.1} parent=1 // loop_footer
      %s24 = sadd.s32 1, %s20
    $region7: #{_b2opt_call.1} parent=1 // loop_footer_branch
      %19 = sbr.rel target = $region3
    $region8: #{_b2opt_call.1} parent=1 // loop_exit
      _
    %1596 = vsyncpa [#allocation4], 1
    %s1597 = scalar_lea.sflag [#allocation4], 1
    %1598 = vsyncpa %s1597, 1
    %1599 = vsyncpa [#allocation7], 1
    %s1600 = scalar_lea.sflag [#allocation7], 1
    %1601 = vsyncpa %s1600, 1
    %1602 = vsyncpa [#allocation5], 1
    %s1603 = scalar_lea.sflag [#allocation5], 1
    %1604 = vsyncpa %s1603, 1
    %1605 = vsyncpa [#allocation11], 1

</llo_original>
